<compile_context>
chip_gen: v7x
topology: tpu7x:2x2x1
jax: 0.10.0
libtpu: 0.0.40
codegen_flags: <defaults>
</compile_context>

<pallas_src>
import functools
import math

import jax
import jax.numpy as jnp
from jax.experimental import pallas as pl
from jax.experimental.pallas import tpu as pltpu


# --------------------------------------------------------------------------- #
# Kernel
# --------------------------------------------------------------------------- #
def _encoder_kernel(
    x_ref,
    wq_ref, bq_ref, wk_ref, bk_ref, wv_ref, bv_ref,
    wout_ref, bout_ref,
    ln1g_ref, ln1b_ref,
    wff1_ref, bff1_ref, wff2_ref, bff2_ref,
    ln2g_ref, ln2b_ref,
    o_ref,
    *,
    num_heads: int,
):
    f32 = jnp.float32
    x = x_ref[0].astype(f32)                      # (S, D) for the current batch element
    D = x.shape[-1]
    hd = D // num_heads
    scale = 1.0 / math.sqrt(hd)

    # ---- Multi-head self-attention (in-projections) ---- #
    q = jnp.dot(x, wq_ref[...], preferred_element_type=f32) + bq_ref[...]   # (S, D)
    k = jnp.dot(x, wk_ref[...], preferred_element_type=f32) + bk_ref[...]   # (S, D)
    v = jnp.dot(x, wv_ref[...], preferred_element_type=f32) + bv_ref[...]   # (S, D)

    # Per-head attention; the out-projection is fused head-wise so no concat
    # of head contexts is ever materialized:  attn = sum_h ctx_h @ Wout[h*hd:(h+1)*hd, :]
    attn = None
    for h in range(num_heads):                    # static unroll (num_heads is small)
        lo, hi = h * hd, (h + 1) * hd
        q_h = q[:, lo:hi]                         # (S, hd)
        k_h = k[:, lo:hi]
        v_h = v[:, lo:hi]
        s = jnp.dot(q_h, k_h.T, preferred_element_type=f32) * scale          # (S, S)
        s = s - jnp.max(s, axis=-1, keepdims=True)
        p = jnp.exp(s)
        p = p / jnp.sum(p, axis=-1, keepdims=True)                            # softmax
        ctx_h = jnp.dot(p, v_h, preferred_element_type=f32)                   # (S, hd)
        part = jnp.dot(ctx_h, wout_ref[lo:hi, :], preferred_element_type=f32)  # (S, D)
        attn = part if attn is None else attn + part
    attn = attn + bout_ref[...]                   # (S, D)

    # TODO(synk): dropout1/dropout2 are identity here (eval/inference mode);
    # training-mode dropout would use pltpu.prng_seed + pltpu.stateful_bernoulli.

    def _layer_norm(y, g_ref, b_ref):
        mu = jnp.mean(y, axis=-1, keepdims=True)
        var = jnp.mean(jnp.square(y - mu), axis=-1, keepdims=True)
        return (y - mu) * jax.lax.rsqrt(var + 1e-5) * g_ref[...] + b_ref[...]

    # ---- residual + LayerNorm 1 ---- #
    ln1 = _layer_norm(x + attn, ln1g_ref, ln1b_ref)                           # (S, D)

    # ---- feed-forward: Linear(D,4D) -> ReLU -> Linear(4D,D) ---- #
    hid = jnp.dot(ln1, wff1_ref[...], preferred_element_type=f32) + bff1_ref[...]  # (S, 4D)
    hid = jnp.maximum(hid, 0.0)
    ff = jnp.dot(hid, wff2_ref[...], preferred_element_type=f32) + bff2_ref[...]   # (S, D)

    # ---- residual + LayerNorm 2 ---- #
    out = _layer_norm(ln1 + ff, ln2g_ref, ln2b_ref)
    o_ref[0] = out.astype(o_ref.dtype)


# --------------------------------------------------------------------------- #
# Wrapper
# --------------------------------------------------------------------------- #
def encoder_forward(x, params, *, num_heads: int = 4):
    """x: (B, S, D).  Returns the encoder-block output, shape (B, S, D)."""
    B, S, D = x.shape
    F = params["wff1"].shape[1]
    assert D % num_heads == 0, "embed dim must be divisible by num_heads"

    def _2d(v):  # 1-D params -> (1, N): TPU-friendly 2-D layout
        return v.reshape(1, -1)

    args = (
        x,
        params["wq"], _2d(params["bq"]),
        params["wk"], _2d(params["bk"]),
        params["wv"], _2d(params["bv"]),
        params["wout"], _2d(params["bout"]),
        _2d(params["ln1g"]), _2d(params["ln1b"]),
        params["wff1"], _2d(params["bff1"]),
        params["wff2"], _2d(params["bff2"]),
        _2d(params["ln2g"]), _2d(params["ln2b"]),
    )

    def _const(shape):  # whole-array block, constant block index (never re-fetched)
        return pl.BlockSpec(shape, lambda b: (0,) * len(shape))

    in_specs = [
        pl.BlockSpec((1, S, D), lambda b: (b, 0, 0)),   # x: one batch element per step
        _const((D, D)), _const((1, D)),                 # wq, bq
        _const((D, D)), _const((1, D)),                 # wk, bk
        _const((D, D)), _const((1, D)),                 # wv, bv
        _const((D, D)), _const((1, D)),                 # wout, bout
        _const((1, D)), _const((1, D)),                 # ln1 gamma, beta
        _const((D, F)), _const((1, F)),                 # wff1, bff1
        _const((F, D)), _const((1, D)),                 # wff2, bff2
        _const((1, D)), _const((1, D)),                 # ln2 gamma, beta
    ]

    kernel = functools.partial(_encoder_kernel, num_heads=num_heads)

    return pl.pallas_call(
        kernel,
        out_shape=jax.ShapeDtypeStruct((B, S, D), x.dtype),
        grid_spec=pltpu.PrefetchScalarGridSpec(
            num_scalar_prefetch=0,
            grid=(B,),
            in_specs=in_specs,
            out_specs=pl.BlockSpec((1, S, D), lambda b: (b, 0, 0)),
        ),
        compiler_params=pltpu.CompilerParams(
            dimension_semantics=("parallel",),         # megacore shards batch steps
            vmem_limit_bytes=32 * 1024 * 1024,          # explicit budget (safe on v5e/v6e/v7x)
        ),
    )(*args)


# --------------------------------------------------------------------------- #
# Pure-JAX reference (same math) for correctness checking
# --------------------------------------------------------------------------- #
def _encoder_ref(x, p, num_heads):
    B, S, D = x.shape
    hd = D // num_heads
    scale = 1.0 / math.sqrt(hd)

    def ln(y, g, b):
        mu = jnp.mean(y, axis=-1, keepdims=True)
        var = jnp.mean(jnp.square(y - mu), axis=-1, keepdims=True)
        return (y - mu) * jax.lax.rsqrt(var + 1e-5) * g + b

    q = x @ p["wq"] + p["bq"]
    k = x @ p["wk"] + p["bk"]
    v = x @ p["wv"] + p["bv"]
    qh = q.reshape(B, S, num_heads, hd).transpose(0, 2, 1, 3)
    kh = k.reshape(B, S, num_heads, hd).transpose(0, 2, 1, 3)
    vh = v.reshape(B, S, num_heads, hd).transpose(0, 2, 1, 3)
    s = jnp.einsum("bhqd,bhkd->bhqk", qh, kh) * scale
    s = s - jnp.max(s, axis=-1, keepdims=True)
    pr = jnp.exp(s)
    pr = pr / jnp.sum(pr, axis=-1, keepdims=True)
    ctx = jnp.einsum("bhqk,bhkd->bhqd", pr, vh).transpose(0, 2, 1, 3).reshape(B, S, D)
    attn = ctx @ p["wout"] + p["bout"]
    ln1 = ln(x + attn, p["ln1g"], p["ln1b"])
    ff = jnp.maximum(ln1 @ p["wff1"] + p["bff1"], 0.0) @ p["wff2"] + p["bff2"]
    return ln(ln1 + ff, p["ln2g"], p["ln2b"])


# --------------------------------------------------------------------------- #
# Demo / correctness check
# --------------------------------------------------------------------------- #
if __name__ == "__main__":
    B, S, D, H = 2, 8, 32, 4          # small shapes; real module uses D=512, H=4
    F = 4 * D

    keys = jax.random.split(jax.random.PRNGKey(0), 18)
    wstd = 1.0 / math.sqrt(D)

    x = jax.random.normal(keys[0], (B, S, D), dtype=jnp.float32)
    params = {
        "wq":   wstd * jax.random.normal(keys[1], (D, D), jnp.float32),
        "bq":   0.1 * jax.random.normal(keys[2], (D,), jnp.float32),
        "wk":   wstd * jax.random.normal(keys[3], (D, D), jnp.float32),
        "bk":   0.1 * jax.random.normal(keys[4], (D,), jnp.float32),
        "wv":   wstd * jax.random.normal(keys[5], (D, D), jnp.float32),
        "bv":   0.1 * jax.random.normal(keys[6], (D,), jnp.float32),
        "wout": wstd * jax.random.normal(keys[7], (D, D), jnp.float32),
        "bout": 0.1 * jax.random.normal(keys[8], (D,), jnp.float32),
        "ln1g": 1.0 + 0.1 * jax.random.normal(keys[9], (D,), jnp.float32),
        "ln1b": 0.1 * jax.random.normal(keys[10], (D,), jnp.float32),
        "wff1": wstd * jax.random.normal(keys[11], (D, F), jnp.float32),
        "bff1": 0.1 * jax.random.normal(keys[12], (F,), jnp.float32),
        "wff2": (1.0 / math.sqrt(F)) * jax.random.normal(keys[13], (F, D), jnp.float32),
        "bff2": 0.1 * jax.random.normal(keys[14], (D,), jnp.float32),
        "ln2g": 1.0 + 0.1 * jax.random.normal(keys[15], (D,), jnp.float32),
        "ln2b": 0.1 * jax.random.normal(keys[16], (D,), jnp.float32),
    }

    out = encoder_forward(x, params, num_heads=H)
    out = jax.block_until_ready(out)

    ref = _encoder_ref(x, params, H)
    assert out.shape == (B, S, D)
    assert jnp.allclose(out, ref, atol=1e-3, rtol=1e-3), "mismatch vs reference"

    print("KERNEL_OK")
</pallas_src>

<mosaic_0001>
module attributes {stable_mosaic.version = 11 : i64} {
  func.func @_encoder_kernel(%arg0: i32, %arg1: memref<1x8x32xf32, #tpu.memory_space<vmem>>, %arg2: memref<32x32xf32, #tpu.memory_space<vmem>>, %arg3: memref<1x32xf32, #tpu.memory_space<vmem>>, %arg4: memref<32x32xf32, #tpu.memory_space<vmem>>, %arg5: memref<1x32xf32, #tpu.memory_space<vmem>>, %arg6: memref<32x32xf32, #tpu.memory_space<vmem>>, %arg7: memref<1x32xf32, #tpu.memory_space<vmem>>, %arg8: memref<32x32xf32, #tpu.memory_space<vmem>>, %arg9: memref<1x32xf32, #tpu.memory_space<vmem>>, %arg10: memref<1x32xf32, #tpu.memory_space<vmem>>, %arg11: memref<1x32xf32, #tpu.memory_space<vmem>>, %arg12: memref<32x128xf32, #tpu.memory_space<vmem>>, %arg13: memref<1x128xf32, #tpu.memory_space<vmem>>, %arg14: memref<128x32xf32, #tpu.memory_space<vmem>>, %arg15: memref<1x32xf32, #tpu.memory_space<vmem>>, %arg16: memref<1x32xf32, #tpu.memory_space<vmem>>, %arg17: memref<1x32xf32, #tpu.memory_space<vmem>>, %arg18: memref<1x8x32xf32, #tpu.memory_space<vmem>>) attributes {dimension_semantics = [#tpu.dimension_semantics<parallel>], iteration_bounds = array<i64: 2>, scalar_prefetch = 0 : i64, scratch_operands = 0 : i64, tpu.core_type = #tpu.core_type<tc>, window_params = [{transform_indices = @transform_0, window_bounds = array<i64: 1, 8, 32>}, {pipeline_mode = #tpu.pipeline_mode<synchronous>, transform_indices = @transform_1, window_bounds = array<i64: 32, 32>}, {pipeline_mode = #tpu.pipeline_mode<synchronous>, transform_indices = @transform_2, window_bounds = array<i64: 1, 32>}, {pipeline_mode = #tpu.pipeline_mode<synchronous>, transform_indices = @transform_3, window_bounds = array<i64: 32, 32>}, {pipeline_mode = #tpu.pipeline_mode<synchronous>, transform_indices = @transform_4, window_bounds = array<i64: 1, 32>}, {pipeline_mode = #tpu.pipeline_mode<synchronous>, transform_indices = @transform_5, window_bounds = array<i64: 32, 32>}, {pipeline_mode = #tpu.pipeline_mode<synchronous>, transform_indices = @transform_6, window_bounds = array<i64: 1, 32>}, {pipeline_mode = #tpu.pipeline_mode<synchronous>, transform_indices = @transform_7, window_bounds = array<i64: 32, 32>}, {pipeline_mode = #tpu.pipeline_mode<synchronous>, transform_indices = @transform_8, window_bounds = array<i64: 1, 32>}, {pipeline_mode = #tpu.pipeline_mode<synchronous>, transform_indices = @transform_9, window_bounds = array<i64: 1, 32>}, {pipeline_mode = #tpu.pipeline_mode<synchronous>, transform_indices = @transform_10, window_bounds = array<i64: 1, 32>}, {pipeline_mode = #tpu.pipeline_mode<synchronous>, transform_indices = @transform_11, window_bounds = array<i64: 32, 128>}, {pipeline_mode = #tpu.pipeline_mode<synchronous>, transform_indices = @transform_12, window_bounds = array<i64: 1, 128>}, {pipeline_mode = #tpu.pipeline_mode<synchronous>, transform_indices = @transform_13, window_bounds = array<i64: 128, 32>}, {pipeline_mode = #tpu.pipeline_mode<synchronous>, transform_indices = @transform_14, window_bounds = array<i64: 1, 32>}, {pipeline_mode = #tpu.pipeline_mode<synchronous>, transform_indices = @transform_15, window_bounds = array<i64: 1, 32>}, {pipeline_mode = #tpu.pipeline_mode<synchronous>, transform_indices = @transform_16, window_bounds = array<i64: 1, 32>}, {transform_indices = @transform_17, window_bounds = array<i64: 1, 8, 32>}]} {
    %c0 = arith.constant 0 : index
    %c0_0 = arith.constant 0 : index
    %c0_1 = arith.constant 0 : index
    %0 = vector.load %arg1[%c0, %c0_0, %c0_1] : memref<1x8x32xf32, #tpu.memory_space<vmem>>, vector<1x8x32xf32>
    %1 = vector.shape_cast %0 : vector<1x8x32xf32> to vector<8x32xf32>
    %c0_2 = arith.constant 0 : index
    %c0_3 = arith.constant 0 : index
    %2 = vector.load %arg2[%c0_2, %c0_3] : memref<32x32xf32, #tpu.memory_space<vmem>>, vector<32x32xf32>
    %cst = arith.constant dense<0.000000e+00> : vector<8x32xf32>
    %3 = tpu.matmul %1, %2, %cst {dimension_numbers = #tpu.dot_dimension_numbers<[1], [0], [0], [1], [0, 0, 1, 1], [], []>} : vector<8x32xf32>, vector<32x32xf32>, vector<8x32xf32> -> vector<8x32xf32>
    %c0_4 = arith.constant 0 : index
    %c0_5 = arith.constant 0 : index
    %4 = vector.load %arg3[%c0_4, %c0_5] : memref<1x32xf32, #tpu.memory_space<vmem>>, vector<1x32xf32>
    %5 = vector.broadcast %4 : vector<1x32xf32> to vector<8x32xf32>
    %6 = arith.addf %3, %5 : vector<8x32xf32>
    %c0_6 = arith.constant 0 : index
    %c0_7 = arith.constant 0 : index
    %7 = vector.load %arg4[%c0_6, %c0_7] : memref<32x32xf32, #tpu.memory_space<vmem>>, vector<32x32xf32>
    %cst_8 = arith.constant dense<0.000000e+00> : vector<8x32xf32>
    %8 = tpu.matmul %1, %7, %cst_8 {dimension_numbers = #tpu.dot_dimension_numbers<[1], [0], [0], [1], [0, 0, 1, 1], [], []>} : vector<8x32xf32>, vector<32x32xf32>, vector<8x32xf32> -> vector<8x32xf32>
    %c0_9 = arith.constant 0 : index
    %c0_10 = arith.constant 0 : index
    %9 = vector.load %arg5[%c0_9, %c0_10] : memref<1x32xf32, #tpu.memory_space<vmem>>, vector<1x32xf32>
    %10 = vector.broadcast %9 : vector<1x32xf32> to vector<8x32xf32>
    %11 = arith.addf %8, %10 : vector<8x32xf32>
    %c0_11 = arith.constant 0 : index
    %c0_12 = arith.constant 0 : index
    %12 = vector.load %arg6[%c0_11, %c0_12] : memref<32x32xf32, #tpu.memory_space<vmem>>, vector<32x32xf32>
    %cst_13 = arith.constant dense<0.000000e+00> : vector<8x32xf32>
    %13 = tpu.matmul %1, %12, %cst_13 {dimension_numbers = #tpu.dot_dimension_numbers<[1], [0], [0], [1], [0, 0, 1, 1], [], []>} : vector<8x32xf32>, vector<32x32xf32>, vector<8x32xf32> -> vector<8x32xf32>
    %c0_14 = arith.constant 0 : index
    %c0_15 = arith.constant 0 : index
    %14 = vector.load %arg7[%c0_14, %c0_15] : memref<1x32xf32, #tpu.memory_space<vmem>>, vector<1x32xf32>
    %15 = vector.broadcast %14 : vector<1x32xf32> to vector<8x32xf32>
    %16 = arith.addf %13, %15 : vector<8x32xf32>
    %17 = vector.extract_strided_slice %6 {offsets = [0, 0], sizes = [8, 8], strides = [1, 1]} : vector<8x32xf32> to vector<8x8xf32>
    %18 = vector.extract_strided_slice %11 {offsets = [0, 0], sizes = [8, 8], strides = [1, 1]} : vector<8x32xf32> to vector<8x8xf32>
    %19 = vector.extract_strided_slice %16 {offsets = [0, 0], sizes = [8, 8], strides = [1, 1]} : vector<8x32xf32> to vector<8x8xf32>
    %20 = tpu.transpose %18, [1, 0] : vector<8x8xf32> -> vector<8x8xf32>
    %cst_16 = arith.constant dense<0.000000e+00> : vector<8x8xf32>
    %21 = tpu.matmul %17, %20, %cst_16 {dimension_numbers = #tpu.dot_dimension_numbers<[1], [0], [0], [1], [0, 0, 1, 1], [], []>} : vector<8x8xf32>, vector<8x8xf32>, vector<8x8xf32> -> vector<8x8xf32>
    %cst_17 = arith.constant 0.353553385 : f32
    %22 = vector.broadcast %cst_17 : f32 to vector<8x8xf32>
    %23 = arith.mulf %21, %22 : vector<8x8xf32>
    %cst_18 = arith.constant dense<0xFF800000> : vector<8xf32>
    %24 = vector.multi_reduction <maximumf>, %23, %cst_18 [1] : vector<8x8xf32> to vector<8xf32>
    %25 = vector.shape_cast %24 : vector<8xf32> to vector<8x1xf32>
    %26 = vector.broadcast %25 : vector<8x1xf32> to vector<8x8xf32>
    %27 = arith.subf %23, %26 : vector<8x8xf32>
    %28 = math.exp %27 : vector<8x8xf32>
    %cst_19 = arith.constant dense<0.000000e+00> : vector<8xf32>
    %29 = vector.multi_reduction <add>, %28, %cst_19 [1] : vector<8x8xf32> to vector<8xf32>
    %30 = vector.shape_cast %29 : vector<8xf32> to vector<8x1xf32>
    %31 = vector.broadcast %30 : vector<8x1xf32> to vector<8x8xf32>
    %32 = arith.divf %28, %31 : vector<8x8xf32>
    %cst_20 = arith.constant dense<0.000000e+00> : vector<8x8xf32>
    %33 = tpu.matmul %32, %19, %cst_20 {dimension_numbers = #tpu.dot_dimension_numbers<[1], [0], [0], [1], [0, 0, 1, 1], [], []>} : vector<8x8xf32>, vector<8x8xf32>, vector<8x8xf32> -> vector<8x8xf32>
    %c0_21 = arith.constant 0 : index
    %c0_22 = arith.constant 0 : index
    %34 = vector.load %arg8[%c0_21, %c0_22] : memref<32x32xf32, #tpu.memory_space<vmem>>, vector<8x32xf32>
    %cst_23 = arith.constant dense<0.000000e+00> : vector<8x32xf32>
    %35 = tpu.matmul %33, %34, %cst_23 {dimension_numbers = #tpu.dot_dimension_numbers<[1], [0], [0], [1], [0, 0, 1, 1], [], []>} : vector<8x8xf32>, vector<8x32xf32>, vector<8x32xf32> -> vector<8x32xf32>
    %36 = vector.extract_strided_slice %6 {offsets = [0, 8], sizes = [8, 8], strides = [1, 1]} : vector<8x32xf32> to vector<8x8xf32>
    %37 = vector.extract_strided_slice %11 {offsets = [0, 8], sizes = [8, 8], strides = [1, 1]} : vector<8x32xf32> to vector<8x8xf32>
    %38 = vector.extract_strided_slice %16 {offsets = [0, 8], sizes = [8, 8], strides = [1, 1]} : vector<8x32xf32> to vector<8x8xf32>
    %39 = tpu.transpose %37, [1, 0] : vector<8x8xf32> -> vector<8x8xf32>
    %cst_24 = arith.constant dense<0.000000e+00> : vector<8x8xf32>
    %40 = tpu.matmul %36, %39, %cst_24 {dimension_numbers = #tpu.dot_dimension_numbers<[1], [0], [0], [1], [0, 0, 1, 1], [], []>} : vector<8x8xf32>, vector<8x8xf32>, vector<8x8xf32> -> vector<8x8xf32>
    %cst_25 = arith.constant 0.353553385 : f32
    %41 = vector.broadcast %cst_25 : f32 to vector<8x8xf32>
    %42 = arith.mulf %40, %41 : vector<8x8xf32>
    %cst_26 = arith.constant dense<0xFF800000> : vector<8xf32>
    %43 = vector.multi_reduction <maximumf>, %42, %cst_26 [1] : vector<8x8xf32> to vector<8xf32>
    %44 = vector.shape_cast %43 : vector<8xf32> to vector<8x1xf32>
    %45 = vector.broadcast %44 : vector<8x1xf32> to vector<8x8xf32>
    %46 = arith.subf %42, %45 : vector<8x8xf32>
    %47 = math.exp %46 : vector<8x8xf32>
    %cst_27 = arith.constant dense<0.000000e+00> : vector<8xf32>
    %48 = vector.multi_reduction <add>, %47, %cst_27 [1] : vector<8x8xf32> to vector<8xf32>
    %49 = vector.shape_cast %48 : vector<8xf32> to vector<8x1xf32>
    %50 = vector.broadcast %49 : vector<8x1xf32> to vector<8x8xf32>
    %51 = arith.divf %47, %50 : vector<8x8xf32>
    %cst_28 = arith.constant dense<0.000000e+00> : vector<8x8xf32>
    %52 = tpu.matmul %51, %38, %cst_28 {dimension_numbers = #tpu.dot_dimension_numbers<[1], [0], [0], [1], [0, 0, 1, 1], [], []>} : vector<8x8xf32>, vector<8x8xf32>, vector<8x8xf32> -> vector<8x8xf32>
    %c8 = arith.constant 8 : index
    %c0_29 = arith.constant 0 : index
    %53 = vector.load %arg8[%c8, %c0_29] : memref<32x32xf32, #tpu.memory_space<vmem>>, vector<8x32xf32>
    %cst_30 = arith.constant dense<0.000000e+00> : vector<8x32xf32>
    %54 = tpu.matmul %52, %53, %cst_30 {dimension_numbers = #tpu.dot_dimension_numbers<[1], [0], [0], [1], [0, 0, 1, 1], [], []>} : vector<8x8xf32>, vector<8x32xf32>, vector<8x32xf32> -> vector<8x32xf32>
    %55 = arith.addf %35, %54 : vector<8x32xf32>
    %56 = vector.extract_strided_slice %6 {offsets = [0, 16], sizes = [8, 8], strides = [1, 1]} : vector<8x32xf32> to vector<8x8xf32>
    %57 = vector.extract_strided_slice %11 {offsets = [0, 16], sizes = [8, 8], strides = [1, 1]} : vector<8x32xf32> to vector<8x8xf32>
    %58 = vector.extract_strided_slice %16 {offsets = [0, 16], sizes = [8, 8], strides = [1, 1]} : vector<8x32xf32> to vector<8x8xf32>
    %59 = tpu.transpose %57, [1, 0] : vector<8x8xf32> -> vector<8x8xf32>
    %cst_31 = arith.constant dense<0.000000e+00> : vector<8x8xf32>
    %60 = tpu.matmul %56, %59, %cst_31 {dimension_numbers = #tpu.dot_dimension_numbers<[1], [0], [0], [1], [0, 0, 1, 1], [], []>} : vector<8x8xf32>, vector<8x8xf32>, vector<8x8xf32> -> vector<8x8xf32>
    %cst_32 = arith.constant 0.353553385 : f32
    %61 = vector.broadcast %cst_32 : f32 to vector<8x8xf32>
    %62 = arith.mulf %60, %61 : vector<8x8xf32>
    %cst_33 = arith.constant dense<0xFF800000> : vector<8xf32>
    %63 = vector.multi_reduction <maximumf>, %62, %cst_33 [1] : vector<8x8xf32> to vector<8xf32>
    %64 = vector.shape_cast %63 : vector<8xf32> to vector<8x1xf32>
    %65 = vector.broadcast %64 : vector<8x1xf32> to vector<8x8xf32>
    %66 = arith.subf %62, %65 : vector<8x8xf32>
    %67 = math.exp %66 : vector<8x8xf32>
    %cst_34 = arith.constant dense<0.000000e+00> : vector<8xf32>
    %68 = vector.multi_reduction <add>, %67, %cst_34 [1] : vector<8x8xf32> to vector<8xf32>
    %69 = vector.shape_cast %68 : vector<8xf32> to vector<8x1xf32>
    %70 = vector.broadcast %69 : vector<8x1xf32> to vector<8x8xf32>
    %71 = arith.divf %67, %70 : vector<8x8xf32>
    %cst_35 = arith.constant dense<0.000000e+00> : vector<8x8xf32>
    %72 = tpu.matmul %71, %58, %cst_35 {dimension_numbers = #tpu.dot_dimension_numbers<[1], [0], [0], [1], [0, 0, 1, 1], [], []>} : vector<8x8xf32>, vector<8x8xf32>, vector<8x8xf32> -> vector<8x8xf32>
    %c16 = arith.constant 16 : index
    %c0_36 = arith.constant 0 : index
    %73 = vector.load %arg8[%c16, %c0_36] : memref<32x32xf32, #tpu.memory_space<vmem>>, vector<8x32xf32>
    %cst_37 = arith.constant dense<0.000000e+00> : vector<8x32xf32>
    %74 = tpu.matmul %72, %73, %cst_37 {dimension_numbers = #tpu.dot_dimension_numbers<[1], [0], [0], [1], [0, 0, 1, 1], [], []>} : vector<8x8xf32>, vector<8x32xf32>, vector<8x32xf32> -> vector<8x32xf32>
    %75 = arith.addf %55, %74 : vector<8x32xf32>
    %76 = vector.extract_strided_slice %6 {offsets = [0, 24], sizes = [8, 8], strides = [1, 1]} : vector<8x32xf32> to vector<8x8xf32>
    %77 = vector.extract_strided_slice %11 {offsets = [0, 24], sizes = [8, 8], strides = [1, 1]} : vector<8x32xf32> to vector<8x8xf32>
    %78 = vector.extract_strided_slice %16 {offsets = [0, 24], sizes = [8, 8], strides = [1, 1]} : vector<8x32xf32> to vector<8x8xf32>
    %79 = tpu.transpose %77, [1, 0] : vector<8x8xf32> -> vector<8x8xf32>
    %cst_38 = arith.constant dense<0.000000e+00> : vector<8x8xf32>
    %80 = tpu.matmul %76, %79, %cst_38 {dimension_numbers = #tpu.dot_dimension_numbers<[1], [0], [0], [1], [0, 0, 1, 1], [], []>} : vector<8x8xf32>, vector<8x8xf32>, vector<8x8xf32> -> vector<8x8xf32>
    %cst_39 = arith.constant 0.353553385 : f32
    %81 = vector.broadcast %cst_39 : f32 to vector<8x8xf32>
    %82 = arith.mulf %80, %81 : vector<8x8xf32>
    %cst_40 = arith.constant dense<0xFF800000> : vector<8xf32>
    %83 = vector.multi_reduction <maximumf>, %82, %cst_40 [1] : vector<8x8xf32> to vector<8xf32>
    %84 = vector.shape_cast %83 : vector<8xf32> to vector<8x1xf32>
    %85 = vector.broadcast %84 : vector<8x1xf32> to vector<8x8xf32>
    %86 = arith.subf %82, %85 : vector<8x8xf32>
    %87 = math.exp %86 : vector<8x8xf32>
    %cst_41 = arith.constant dense<0.000000e+00> : vector<8xf32>
    %88 = vector.multi_reduction <add>, %87, %cst_41 [1] : vector<8x8xf32> to vector<8xf32>
    %89 = vector.shape_cast %88 : vector<8xf32> to vector<8x1xf32>
    %90 = vector.broadcast %89 : vector<8x1xf32> to vector<8x8xf32>
    %91 = arith.divf %87, %90 : vector<8x8xf32>
    %cst_42 = arith.constant dense<0.000000e+00> : vector<8x8xf32>
    %92 = tpu.matmul %91, %78, %cst_42 {dimension_numbers = #tpu.dot_dimension_numbers<[1], [0], [0], [1], [0, 0, 1, 1], [], []>} : vector<8x8xf32>, vector<8x8xf32>, vector<8x8xf32> -> vector<8x8xf32>
    %c24 = arith.constant 24 : index
    %c0_43 = arith.constant 0 : index
    %93 = vector.load %arg8[%c24, %c0_43] : memref<32x32xf32, #tpu.memory_space<vmem>>, vector<8x32xf32>
    %cst_44 = arith.constant dense<0.000000e+00> : vector<8x32xf32>
    %94 = tpu.matmul %92, %93, %cst_44 {dimension_numbers = #tpu.dot_dimension_numbers<[1], [0], [0], [1], [0, 0, 1, 1], [], []>} : vector<8x8xf32>, vector<8x32xf32>, vector<8x32xf32> -> vector<8x32xf32>
    %95 = arith.addf %75, %94 : vector<8x32xf32>
    %c0_45 = arith.constant 0 : index
    %c0_46 = arith.constant 0 : index
    %96 = vector.load %arg9[%c0_45, %c0_46] : memref<1x32xf32, #tpu.memory_space<vmem>>, vector<1x32xf32>
    %97 = vector.broadcast %96 : vector<1x32xf32> to vector<8x32xf32>
    %98 = arith.addf %95, %97 : vector<8x32xf32>
    %99 = arith.addf %1, %98 : vector<8x32xf32>
    %cst_47 = arith.constant dense<0.000000e+00> : vector<8xf32>
    %100 = vector.multi_reduction <add>, %99, %cst_47 [1] : vector<8x32xf32> to vector<8xf32>
    %101 = vector.shape_cast %100 : vector<8xf32> to vector<8x1xf32>
    %cst_48 = arith.constant 3.200000e+01 : f32
    %102 = vector.broadcast %cst_48 : f32 to vector<8x1xf32>
    %103 = arith.divf %101, %102 : vector<8x1xf32>
    %104 = vector.broadcast %103 : vector<8x1xf32> to vector<8x32xf32>
    %105 = arith.subf %99, %104 : vector<8x32xf32>
    %106 = arith.mulf %105, %105 : vector<8x32xf32>
    %cst_49 = arith.constant dense<0.000000e+00> : vector<8xf32>
    %107 = vector.multi_reduction <add>, %106, %cst_49 [1] : vector<8x32xf32> to vector<8xf32>
    %108 = vector.shape_cast %107 : vector<8xf32> to vector<8x1xf32>
    %cst_50 = arith.constant 3.200000e+01 : f32
    %109 = vector.broadcast %cst_50 : f32 to vector<8x1xf32>
    %110 = arith.divf %108, %109 : vector<8x1xf32>
    %111 = vector.broadcast %103 : vector<8x1xf32> to vector<8x32xf32>
    %112 = arith.subf %99, %111 : vector<8x32xf32>
    %cst_51 = arith.constant 9.99999974E-6 : f32
    %113 = vector.broadcast %cst_51 : f32 to vector<8x1xf32>
    %114 = arith.addf %110, %113 : vector<8x1xf32>
    %115 = math.rsqrt %114 : vector<8x1xf32>
    %116 = vector.broadcast %115 : vector<8x1xf32> to vector<8x32xf32>
    %117 = arith.mulf %112, %116 : vector<8x32xf32>
    %c0_52 = arith.constant 0 : index
    %c0_53 = arith.constant 0 : index
    %118 = vector.load %arg10[%c0_52, %c0_53] : memref<1x32xf32, #tpu.memory_space<vmem>>, vector<1x32xf32>
    %119 = vector.broadcast %118 : vector<1x32xf32> to vector<8x32xf32>
    %120 = arith.mulf %117, %119 : vector<8x32xf32>
    %c0_54 = arith.constant 0 : index
    %c0_55 = arith.constant 0 : index
    %121 = vector.load %arg11[%c0_54, %c0_55] : memref<1x32xf32, #tpu.memory_space<vmem>>, vector<1x32xf32>
    %122 = vector.broadcast %121 : vector<1x32xf32> to vector<8x32xf32>
    %123 = arith.addf %120, %122 : vector<8x32xf32>
    %c0_56 = arith.constant 0 : index
    %c0_57 = arith.constant 0 : index
    %124 = vector.load %arg12[%c0_56, %c0_57] : memref<32x128xf32, #tpu.memory_space<vmem>>, vector<32x128xf32>
    %cst_58 = arith.constant dense<0.000000e+00> : vector<8x128xf32>
    %125 = tpu.matmul %123, %124, %cst_58 {dimension_numbers = #tpu.dot_dimension_numbers<[1], [0], [0], [1], [0, 0, 1, 1], [], []>} : vector<8x32xf32>, vector<32x128xf32>, vector<8x128xf32> -> vector<8x128xf32>
    %c0_59 = arith.constant 0 : index
    %c0_60 = arith.constant 0 : index
    %126 = vector.load %arg13[%c0_59, %c0_60] : memref<1x128xf32, #tpu.memory_space<vmem>>, vector<1x128xf32>
    %127 = vector.broadcast %126 : vector<1x128xf32> to vector<8x128xf32>
    %128 = arith.addf %125, %127 : vector<8x128xf32>
    %cst_61 = arith.constant 0.000000e+00 : f32
    %129 = vector.broadcast %cst_61 : f32 to vector<8x128xf32>
    %130 = arith.maximumf %128, %129 : vector<8x128xf32>
    %c0_62 = arith.constant 0 : index
    %c0_63 = arith.constant 0 : index
    %131 = vector.load %arg14[%c0_62, %c0_63] : memref<128x32xf32, #tpu.memory_space<vmem>>, vector<128x32xf32>
    %cst_64 = arith.constant dense<0.000000e+00> : vector<8x32xf32>
    %132 = tpu.matmul %130, %131, %cst_64 {dimension_numbers = #tpu.dot_dimension_numbers<[1], [0], [0], [1], [0, 0, 1, 1], [], []>} : vector<8x128xf32>, vector<128x32xf32>, vector<8x32xf32> -> vector<8x32xf32>
    %c0_65 = arith.constant 0 : index
    %c0_66 = arith.constant 0 : index
    %133 = vector.load %arg15[%c0_65, %c0_66] : memref<1x32xf32, #tpu.memory_space<vmem>>, vector<1x32xf32>
    %134 = vector.broadcast %133 : vector<1x32xf32> to vector<8x32xf32>
    %135 = arith.addf %132, %134 : vector<8x32xf32>
    %136 = arith.addf %123, %135 : vector<8x32xf32>
    %cst_67 = arith.constant dense<0.000000e+00> : vector<8xf32>
    %137 = vector.multi_reduction <add>, %136, %cst_67 [1] : vector<8x32xf32> to vector<8xf32>
    %138 = vector.shape_cast %137 : vector<8xf32> to vector<8x1xf32>
    %cst_68 = arith.constant 3.200000e+01 : f32
    %139 = vector.broadcast %cst_68 : f32 to vector<8x1xf32>
    %140 = arith.divf %138, %139 : vector<8x1xf32>
    %141 = vector.broadcast %140 : vector<8x1xf32> to vector<8x32xf32>
    %142 = arith.subf %136, %141 : vector<8x32xf32>
    %143 = arith.mulf %142, %142 : vector<8x32xf32>
    %cst_69 = arith.constant dense<0.000000e+00> : vector<8xf32>
    %144 = vector.multi_reduction <add>, %143, %cst_69 [1] : vector<8x32xf32> to vector<8xf32>
    %145 = vector.shape_cast %144 : vector<8xf32> to vector<8x1xf32>
    %cst_70 = arith.constant 3.200000e+01 : f32
    %146 = vector.broadcast %cst_70 : f32 to vector<8x1xf32>
    %147 = arith.divf %145, %146 : vector<8x1xf32>
    %148 = vector.broadcast %140 : vector<8x1xf32> to vector<8x32xf32>
    %149 = arith.subf %136, %148 : vector<8x32xf32>
    %cst_71 = arith.constant 9.99999974E-6 : f32
    %150 = vector.broadcast %cst_71 : f32 to vector<8x1xf32>
    %151 = arith.addf %147, %150 : vector<8x1xf32>
    %152 = math.rsqrt %151 : vector<8x1xf32>
    %153 = vector.broadcast %152 : vector<8x1xf32> to vector<8x32xf32>
    %154 = arith.mulf %149, %153 : vector<8x32xf32>
    %c0_72 = arith.constant 0 : index
    %c0_73 = arith.constant 0 : index
    %155 = vector.load %arg16[%c0_72, %c0_73] : memref<1x32xf32, #tpu.memory_space<vmem>>, vector<1x32xf32>
    %156 = vector.broadcast %155 : vector<1x32xf32> to vector<8x32xf32>
    %157 = arith.mulf %154, %156 : vector<8x32xf32>
    %c0_74 = arith.constant 0 : index
    %c0_75 = arith.constant 0 : index
    %158 = vector.load %arg17[%c0_74, %c0_75] : memref<1x32xf32, #tpu.memory_space<vmem>>, vector<1x32xf32>
    %159 = vector.broadcast %158 : vector<1x32xf32> to vector<8x32xf32>
    %160 = arith.addf %157, %159 : vector<8x32xf32>
    %c0_76 = arith.constant 0 : index
    %c0_77 = arith.constant 0 : index
    %c0_78 = arith.constant 0 : index
    %161 = vector.load %arg18[%c0_76, %c0_77, %c0_78] : memref<1x8x32xf32, #tpu.memory_space<vmem>>, vector<1x8x32xf32>
    %162 = vector.shape_cast %161 : vector<1x8x32xf32> to vector<8x32xf32>
    %163 = vector.shape_cast %160 : vector<8x32xf32> to vector<1x8x32xf32>
    tpu.vector_store %arg18[%c0_76, %c0_77, %c0_78], %163 {strides = array<i32>} : memref<1x8x32xf32, #tpu.memory_space<vmem>>, vector<1x8x32xf32>,
    return
  }
  func.func @transform_0(%arg0: i32) -> (i32, i32, i32) {
    %c0_i32 = arith.constant 0 : i32
    %c0_i32_0 = arith.constant 0 : i32
    %c0_i32_1 = arith.constant 0 : i32
    return %arg0, %c0_i32, %c0_i32_0 : i32, i32, i32
  }
  func.func @transform_1(%arg0: i32) -> (i32, i32) {
    %c0_i32 = arith.constant 0 : i32
    %c0_i32_0 = arith.constant 0 : i32
    %c0_i32_1 = arith.constant 0 : i32
    return %c0_i32, %c0_i32_0 : i32, i32
  }
  func.func @transform_2(%arg0: i32) -> (i32, i32) {
    %c0_i32 = arith.constant 0 : i32
    %c0_i32_0 = arith.constant 0 : i32
    %c0_i32_1 = arith.constant 0 : i32
    return %c0_i32, %c0_i32_0 : i32, i32
  }
  func.func @transform_3(%arg0: i32) -> (i32, i32) {
    %c0_i32 = arith.constant 0 : i32
    %c0_i32_0 = arith.constant 0 : i32
    %c0_i32_1 = arith.constant 0 : i32
    return %c0_i32, %c0_i32_0 : i32, i32
  }
  func.func @transform_4(%arg0: i32) -> (i32, i32) {
    %c0_i32 = arith.constant 0 : i32
    %c0_i32_0 = arith.constant 0 : i32
    %c0_i32_1 = arith.constant 0 : i32
    return %c0_i32, %c0_i32_0 : i32, i32
  }
  func.func @transform_5(%arg0: i32) -> (i32, i32) {
    %c0_i32 = arith.constant 0 : i32
    %c0_i32_0 = arith.constant 0 : i32
    %c0_i32_1 = arith.constant 0 : i32
    return %c0_i32, %c0_i32_0 : i32, i32
  }
  func.func @transform_6(%arg0: i32) -> (i32, i32) {
    %c0_i32 = arith.constant 0 : i32
    %c0_i32_0 = arith.constant 0 : i32
    %c0_i32_1 = arith.constant 0 : i32
    return %c0_i32, %c0_i32_0 : i32, i32
  }
  func.func @transform_7(%arg0: i32) -> (i32, i32) {
    %c0_i32 = arith.constant 0 : i32
    %c0_i32_0 = arith.constant 0 : i32
    %c0_i32_1 = arith.constant 0 : i32
    return %c0_i32, %c0_i32_0 : i32, i32
  }
  func.func @transform_8(%arg0: i32) -> (i32, i32) {
    %c0_i32 = arith.constant 0 : i32
    %c0_i32_0 = arith.constant 0 : i32
    %c0_i32_1 = arith.constant 0 : i32
    return %c0_i32, %c0_i32_0 : i32, i32
  }
  func.func @transform_9(%arg0: i32) -> (i32, i32) {
    %c0_i32 = arith.constant 0 : i32
    %c0_i32_0 = arith.constant 0 : i32
    %c0_i32_1 = arith.constant 0 : i32
    return %c0_i32, %c0_i32_0 : i32, i32
  }
  func.func @transform_10(%arg0: i32) -> (i32, i32) {
    %c0_i32 = arith.constant 0 : i32
    %c0_i32_0 = arith.constant 0 : i32
    %c0_i32_1 = arith.constant 0 : i32
    return %c0_i32, %c0_i32_0 : i32, i32
  }
  func.func @transform_11(%arg0: i32) -> (i32, i32) {
    %c0_i32 = arith.constant 0 : i32
    %c0_i32_0 = arith.constant 0 : i32
    %c0_i32_1 = arith.constant 0 : i32
    return %c0_i32, %c0_i32_0 : i32, i32
  }
  func.func @transform_12(%arg0: i32) -> (i32, i32) {
    %c0_i32 = arith.constant 0 : i32
    %c0_i32_0 = arith.constant 0 : i32
    %c0_i32_1 = arith.constant 0 : i32
    return %c0_i32, %c0_i32_0 : i32, i32
  }
  func.func @transform_13(%arg0: i32) -> (i32, i32) {
    %c0_i32 = arith.constant 0 : i32
    %c0_i32_0 = arith.constant 0 : i32
    %c0_i32_1 = arith.constant 0 : i32
    return %c0_i32, %c0_i32_0 : i32, i32
  }
  func.func @transform_14(%arg0: i32) -> (i32, i32) {
    %c0_i32 = arith.constant 0 : i32
    %c0_i32_0 = arith.constant 0 : i32
    %c0_i32_1 = arith.constant 0 : i32
    return %c0_i32, %c0_i32_0 : i32, i32
  }
  func.func @transform_15(%arg0: i32) -> (i32, i32) {
    %c0_i32 = arith.constant 0 : i32
    %c0_i32_0 = arith.constant 0 : i32
    %c0_i32_1 = arith.constant 0 : i32
    return %c0_i32, %c0_i32_0 : i32, i32
  }
  func.func @transform_16(%arg0: i32) -> (i32, i32) {
    %c0_i32 = arith.constant 0 : i32
    %c0_i32_0 = arith.constant 0 : i32
    %c0_i32_1 = arith.constant 0 : i32
    return %c0_i32, %c0_i32_0 : i32, i32
  }
  func.func @transform_17(%arg0: i32) -> (i32, i32, i32) {
    %c0_i32 = arith.constant 0 : i32
    %c0_i32_0 = arith.constant 0 : i32
    %c0_i32_1 = arith.constant 0 : i32
    return %arg0, %c0_i32, %c0_i32_0 : i32, i32, i32
  }
}

</mosaic_0001>

<llo_original>
// kernel: tpu_custom_call.1
$region0: #{tpu_custom_call.1}
  #allocation0 [shape = 'u32[]', space=smem, size = 0x4, offset = 0x4, fixed_abs, tag = 'smem constant byte address 0x4 - core index']
  #allocation1 [shape = 'u32[144,128]{1,0:T(1,128)}', space=vmem, size = 0x12000, scoped, tag = 'internal scratch']
  %s0 = inlined_call_operand.hbm [shape: f32[2,8,32], index: 0, kind: input, shape index: {}]
  %s1 = inlined_call_operand.vmem [shape: f32[32,32], index: 1, kind: input, shape index: {}]
  %s2 = inlined_call_operand.vmem [shape: f32[1,32], index: 2, kind: input, shape index: {}]
  %s3 = inlined_call_operand.vmem [shape: f32[32,32], index: 3, kind: input, shape index: {}]
  %s4 = inlined_call_operand.vmem [shape: f32[1,32], index: 4, kind: input, shape index: {}]
  %s5 = inlined_call_operand.vmem [shape: f32[32,32], index: 5, kind: input, shape index: {}]
  %s6 = inlined_call_operand.vmem [shape: f32[1,32], index: 6, kind: input, shape index: {}]
  %s7 = inlined_call_operand.vmem [shape: f32[32,32], index: 7, kind: input, shape index: {}]
  %s8 = inlined_call_operand.vmem [shape: f32[1,32], index: 8, kind: input, shape index: {}]
  %s9 = inlined_call_operand.vmem [shape: f32[1,32], index: 9, kind: input, shape index: {}]
  %s10 = inlined_call_operand.vmem [shape: f32[1,32], index: 10, kind: input, shape index: {}]
  %s11 = inlined_call_operand.vmem [shape: f32[32,128], index: 11, kind: input, shape index: {}]
  %s12 = inlined_call_operand.vmem [shape: f32[1,128], index: 12, kind: input, shape index: {}]
  %s13 = inlined_call_operand.vmem [shape: f32[128,32], index: 13, kind: input, shape index: {}]
  %s14 = inlined_call_operand.vmem [shape: f32[1,32], index: 14, kind: input, shape index: {}]
  %s15 = inlined_call_operand.vmem [shape: f32[1,32], index: 15, kind: input, shape index: {}]
  %s16 = inlined_call_operand.vmem [shape: f32[1,32], index: 16, kind: input, shape index: {}]
  %s17 = inlined_call_operand.hbm [shape: f32[2,8,32], index: 17, kind: output, shape index: {}]
  %s18 = sld [smem:[#allocation0]]
  $region105: #{tpu_custom_call.1} parent=0
    _
  %s20 = ssub.s32 1, %s18
  %s21 = scalar_select 0, %s20, %s18
  $region1: #{tpu_custom_call.1} parent=0
    #allocation2 [shape = 'u8[8192]{0}', space=vmem, size = 0x2000, scoped, tag = 'input window, operand 0']
    #allocation3 [shape = 's32[2]{0}', space=sflag, size = 0x8, scoped, tag = 'scoped memory for tpu_custom_call.1']
    #allocation4 [shape = 's32[2]{0}', space=sflag, size = 0x8, scoped, tag = 'scoped memory for tpu_custom_call.1']
    #allocation5 [shape = 'u8[8192]{0}', space=vmem, size = 0x2000, scoped, tag = 'output window, operand 0']
    %22 = vsyncpa [#allocation3], 0
    %s23 = scalar_lea.sflag [#allocation3], 1
    %24 = vsyncpa %s23, 0
    %25 = vsyncpa [#allocation4], 0
    %s26 = scalar_lea.sflag [#allocation4], 1
    %27 = vsyncpa %s26, 0
    loop: start=0, step=1, limit=4
    $region2: #{tpu_custom_call.1} parent=1 // loop_pre_header
      _
    $region3: #{tpu_custom_call.1} parent=1 // loop_header
      %s29 = sphi 0, %s33
      %p30 = scmp.ge.s32.totalorder %s29, 4
      %s39 = sphi 0, %s41
      %s42 = sphi 0, %s39
      %s43 = sphi 0, %s42
      %s59 = sphi 0, %s43
      %s63 = sphi 0, %s63
      %s65 = sphi 0, %s63
      %s66 = sphi 0, %s65
      %s80 = sphi 0, %s66
      %s84 = sphi 0, %s84
      %s86 = sphi 0, %s84
      %s87 = sphi 0, %s86
      %s101 = sphi 0, %s87
      %s105 = sphi 0, %s105
      %s107 = sphi 0, %s105
      %s108 = sphi 0, %s107
      %s122 = sphi 0, %s108
      %s126 = sphi 0, %s126
      %s128 = sphi 0, %s126
      %s129 = sphi 0, %s128
      %s143 = sphi 0, %s129
      %s147 = sphi 0, %s147
      %s149 = sphi 0, %s147
      %s150 = sphi 0, %s149
      %s164 = sphi 0, %s150
      %s168 = sphi 0, %s168
      %s170 = sphi 0, %s168
      %s171 = sphi 0, %s170
      %s185 = sphi 0, %s171
      %s189 = sphi 0, %s189
      %s191 = sphi 0, %s189
      %s192 = sphi 0, %s191
      %s206 = sphi 0, %s192
      %s210 = sphi 0, %s210
      %s212 = sphi 0, %s210
      %s213 = sphi 0, %s212
      %s227 = sphi 0, %s213
      %s231 = sphi 0, %s231
      %s233 = sphi 0, %s231
      %s234 = sphi 0, %s233
      %s248 = sphi 0, %s234
      %s252 = sphi 0, %s252
      %s254 = sphi 0, %s252
      %s255 = sphi 0, %s254
      %s269 = sphi 0, %s255
      %s273 = sphi 0, %s273
      %s275 = sphi 0, %s273
      %s276 = sphi 0, %s275
      %s290 = sphi 0, %s276
      %s294 = sphi 0, %s294
      %s296 = sphi 0, %s294
      %s297 = sphi 0, %s296
      %s311 = sphi 0, %s297
      %s315 = sphi 0, %s315
      %s317 = sphi 0, %s315
      %s318 = sphi 0, %s317
      %s332 = sphi 0, %s318
      %s336 = sphi 0, %s336
      %s338 = sphi 0, %s336
      %s339 = sphi 0, %s338
      %s353 = sphi 0, %s339
      %s357 = sphi 0, %s357
      %s359 = sphi 0, %s357
      %s360 = sphi 0, %s359
      %s374 = sphi 0, %s360
      %s378 = sphi 0, %s378
      %s380 = sphi 0, %s378
      %s381 = sphi 0, %s380
      %s395 = sphi 0, %s381
      %s401 = sphi 0, %s403
      %s404 = sphi 0, %s401
      %s405 = sphi 0, %s404
      %s421 = sphi 0, %s405
    $region4: #{tpu_custom_call.1} parent=1 // loop_header_branch
      %32 = sbr.rel (%p30) target = $region8
    $region5: #{tpu_custom_call.1} parent=1 // loop_body
      %s34 = ssub.s32 %s29, 1
      %s35 = ssub.s32 %s29, 2
      %s36 = sadd.s32 %s29, 1
      %s37 = ssub.s32 %s29, %s36
      %p38 = scmp.eq.s32.totalorder %s37, 0
      %s40 = sadd.s32 %s39, 1
      %s41 = scalar_select %p38, %s39, %s40
      %p44 = pneg %p38
      %p45 = scmp.eq.s32.totalorder %s29, 1
      %p46 = por %p44, %p45
      %p47 = scmp.ne.s32.totalorder %s39, %s42
      %p48 = scmp.eq.s32.totalorder %s29, 0
      %p49 = por %p47, %p48
      %p50 = scmp.ne.s32.totalorder %s39, %s42
      %p51 = scmp.eq.s32.totalorder %s34, 1
      %p52 = por %p50, %p51
      %p53 = scmp.ne.s32.totalorder %s42, %s43
      %p54 = scmp.eq.s32.totalorder %s34, 0
      %p55 = por %p53, %p54
      %p56 = scmp.ne.s32.totalorder %s42, %s43
      %p57 = scmp.eq.s32.totalorder %s35, 1
      %p58 = por %p56, %p57
      %p60 = scmp.ne.s32.totalorder %s43, %s59
      %p61 = scmp.eq.s32.totalorder %s35, 0
      %p62 = por %p60, %p61
      %s64 = sadd.s32 %s63, 1
      %p67 = scmp.eq.s32.totalorder %s29, 1
      %p68 = scmp.ne.s32.totalorder %s63, %s65
      %p69 = scmp.eq.s32.totalorder %s29, 0
      %p70 = por %p68, %p69
      %p71 = scmp.ne.s32.totalorder %s63, %s65
      %p72 = scmp.eq.s32.totalorder %s34, 1
      %p73 = por %p71, %p72
      %p74 = scmp.ne.s32.totalorder %s65, %s66
      %p75 = scmp.eq.s32.totalorder %s34, 0
      %p76 = por %p74, %p75
      %p77 = scmp.ne.s32.totalorder %s65, %s66
      %p78 = scmp.eq.s32.totalorder %s35, 1
      %p79 = por %p77, %p78
      %p81 = scmp.ne.s32.totalorder %s66, %s80
      %p82 = scmp.eq.s32.totalorder %s35, 0
      %p83 = por %p81, %p82
      %s85 = sadd.s32 %s84, 1
      %p88 = scmp.eq.s32.totalorder %s29, 1
      %p89 = scmp.ne.s32.totalorder %s84, %s86
      %p90 = scmp.eq.s32.totalorder %s29, 0
      %p91 = por %p89, %p90
      %p92 = scmp.ne.s32.totalorder %s84, %s86
      %p93 = scmp.eq.s32.totalorder %s34, 1
      %p94 = por %p92, %p93
      %p95 = scmp.ne.s32.totalorder %s86, %s87
      %p96 = scmp.eq.s32.totalorder %s34, 0
      %p97 = por %p95, %p96
      %p98 = scmp.ne.s32.totalorder %s86, %s87
      %p99 = scmp.eq.s32.totalorder %s35, 1
      %p100 = por %p98, %p99
      %p102 = scmp.ne.s32.totalorder %s87, %s101
      %p103 = scmp.eq.s32.totalorder %s35, 0
      %p104 = por %p102, %p103
      %s106 = sadd.s32 %s105, 1
      %p109 = scmp.eq.s32.totalorder %s29, 1
      %p110 = scmp.ne.s32.totalorder %s105, %s107
      %p111 = scmp.eq.s32.totalorder %s29, 0
      %p112 = por %p110, %p111
      %p113 = scmp.ne.s32.totalorder %s105, %s107
      %p114 = scmp.eq.s32.totalorder %s34, 1
      %p115 = por %p113, %p114
      %p116 = scmp.ne.s32.totalorder %s107, %s108
      %p117 = scmp.eq.s32.totalorder %s34, 0
      %p118 = por %p116, %p117
      %p119 = scmp.ne.s32.totalorder %s107, %s108
      %p120 = scmp.eq.s32.totalorder %s35, 1
      %p121 = por %p119, %p120
      %p123 = scmp.ne.s32.totalorder %s108, %s122
      %p124 = scmp.eq.s32.totalorder %s35, 0
      %p125 = por %p123, %p124
      %s127 = sadd.s32 %s126, 1
      %p130 = scmp.eq.s32.totalorder %s29, 1
      %p131 = scmp.ne.s32.totalorder %s126, %s128
      %p132 = scmp.eq.s32.totalorder %s29, 0
      %p133 = por %p131, %p132
      %p134 = scmp.ne.s32.totalorder %s126, %s128
      %p135 = scmp.eq.s32.totalorder %s34, 1
      %p136 = por %p134, %p135
      %p137 = scmp.ne.s32.totalorder %s128, %s129
      %p138 = scmp.eq.s32.totalorder %s34, 0
      %p139 = por %p137, %p138
      %p140 = scmp.ne.s32.totalorder %s128, %s129
      %p141 = scmp.eq.s32.totalorder %s35, 1
      %p142 = por %p140, %p141
      %p144 = scmp.ne.s32.totalorder %s129, %s143
      %p145 = scmp.eq.s32.totalorder %s35, 0
      %p146 = por %p144, %p145
      %s148 = sadd.s32 %s147, 1
      %p151 = scmp.eq.s32.totalorder %s29, 1
      %p152 = scmp.ne.s32.totalorder %s147, %s149
      %p153 = scmp.eq.s32.totalorder %s29, 0
      %p154 = por %p152, %p153
      %p155 = scmp.ne.s32.totalorder %s147, %s149
      %p156 = scmp.eq.s32.totalorder %s34, 1
      %p157 = por %p155, %p156
      %p158 = scmp.ne.s32.totalorder %s149, %s150
      %p159 = scmp.eq.s32.totalorder %s34, 0
      %p160 = por %p158, %p159
      %p161 = scmp.ne.s32.totalorder %s149, %s150
      %p162 = scmp.eq.s32.totalorder %s35, 1
      %p163 = por %p161, %p162
      %p165 = scmp.ne.s32.totalorder %s150, %s164
      %p166 = scmp.eq.s32.totalorder %s35, 0
      %p167 = por %p165, %p166
      %s169 = sadd.s32 %s168, 1
      %p172 = scmp.eq.s32.totalorder %s29, 1
      %p173 = scmp.ne.s32.totalorder %s168, %s170
      %p174 = scmp.eq.s32.totalorder %s29, 0
      %p175 = por %p173, %p174
      %p176 = scmp.ne.s32.totalorder %s168, %s170
      %p177 = scmp.eq.s32.totalorder %s34, 1
      %p178 = por %p176, %p177
      %p179 = scmp.ne.s32.totalorder %s170, %s171
      %p180 = scmp.eq.s32.totalorder %s34, 0
      %p181 = por %p179, %p180
      %p182 = scmp.ne.s32.totalorder %s170, %s171
      %p183 = scmp.eq.s32.totalorder %s35, 1
      %p184 = por %p182, %p183
      %p186 = scmp.ne.s32.totalorder %s171, %s185
      %p187 = scmp.eq.s32.totalorder %s35, 0
      %p188 = por %p186, %p187
      %s190 = sadd.s32 %s189, 1
      %p193 = scmp.eq.s32.totalorder %s29, 1
      %p194 = scmp.ne.s32.totalorder %s189, %s191
      %p195 = scmp.eq.s32.totalorder %s29, 0
      %p196 = por %p194, %p195
      %p197 = scmp.ne.s32.totalorder %s189, %s191
      %p198 = scmp.eq.s32.totalorder %s34, 1
      %p199 = por %p197, %p198
      %p200 = scmp.ne.s32.totalorder %s191, %s192
      %p201 = scmp.eq.s32.totalorder %s34, 0
      %p202 = por %p200, %p201
      %p203 = scmp.ne.s32.totalorder %s191, %s192
      %p204 = scmp.eq.s32.totalorder %s35, 1
      %p205 = por %p203, %p204
      %p207 = scmp.ne.s32.totalorder %s192, %s206
      %p208 = scmp.eq.s32.totalorder %s35, 0
      %p209 = por %p207, %p208
      %s211 = sadd.s32 %s210, 1
      %p214 = scmp.eq.s32.totalorder %s29, 1
      %p215 = scmp.ne.s32.totalorder %s210, %s212
      %p216 = scmp.eq.s32.totalorder %s29, 0
      %p217 = por %p215, %p216
      %p218 = scmp.ne.s32.totalorder %s210, %s212
      %p219 = scmp.eq.s32.totalorder %s34, 1
      %p220 = por %p218, %p219
      %p221 = scmp.ne.s32.totalorder %s212, %s213
      %p222 = scmp.eq.s32.totalorder %s34, 0
      %p223 = por %p221, %p222
      %p224 = scmp.ne.s32.totalorder %s212, %s213
      %p225 = scmp.eq.s32.totalorder %s35, 1
      %p226 = por %p224, %p225
      %p228 = scmp.ne.s32.totalorder %s213, %s227
      %p229 = scmp.eq.s32.totalorder %s35, 0
      %p230 = por %p228, %p229
      %s232 = sadd.s32 %s231, 1
      %p235 = scmp.eq.s32.totalorder %s29, 1
      %p236 = scmp.ne.s32.totalorder %s231, %s233
      %p237 = scmp.eq.s32.totalorder %s29, 0
      %p238 = por %p236, %p237
      %p239 = scmp.ne.s32.totalorder %s231, %s233
      %p240 = scmp.eq.s32.totalorder %s34, 1
      %p241 = por %p239, %p240
      %p242 = scmp.ne.s32.totalorder %s233, %s234
      %p243 = scmp.eq.s32.totalorder %s34, 0
      %p244 = por %p242, %p243
      %p245 = scmp.ne.s32.totalorder %s233, %s234
      %p246 = scmp.eq.s32.totalorder %s35, 1
      %p247 = por %p245, %p246
      %p249 = scmp.ne.s32.totalorder %s234, %s248
      %p250 = scmp.eq.s32.totalorder %s35, 0
      %p251 = por %p249, %p250
      %s253 = sadd.s32 %s252, 1
      %p256 = scmp.eq.s32.totalorder %s29, 1
      %p257 = scmp.ne.s32.totalorder %s252, %s254
      %p258 = scmp.eq.s32.totalorder %s29, 0
      %p259 = por %p257, %p258
      %p260 = scmp.ne.s32.totalorder %s252, %s254
      %p261 = scmp.eq.s32.totalorder %s34, 1
      %p262 = por %p260, %p261
      %p263 = scmp.ne.s32.totalorder %s254, %s255
      %p264 = scmp.eq.s32.totalorder %s34, 0
      %p265 = por %p263, %p264
      %p266 = scmp.ne.s32.totalorder %s254, %s255
      %p267 = scmp.eq.s32.totalorder %s35, 1
      %p268 = por %p266, %p267
      %p270 = scmp.ne.s32.totalorder %s255, %s269
      %p271 = scmp.eq.s32.totalorder %s35, 0
      %p272 = por %p270, %p271
      %s274 = sadd.s32 %s273, 1
      %p277 = scmp.eq.s32.totalorder %s29, 1
      %p278 = scmp.ne.s32.totalorder %s273, %s275
      %p279 = scmp.eq.s32.totalorder %s29, 0
      %p280 = por %p278, %p279
      %p281 = scmp.ne.s32.totalorder %s273, %s275
      %p282 = scmp.eq.s32.totalorder %s34, 1
      %p283 = por %p281, %p282
      %p284 = scmp.ne.s32.totalorder %s275, %s276
      %p285 = scmp.eq.s32.totalorder %s34, 0
      %p286 = por %p284, %p285
      %p287 = scmp.ne.s32.totalorder %s275, %s276
      %p288 = scmp.eq.s32.totalorder %s35, 1
      %p289 = por %p287, %p288
      %p291 = scmp.ne.s32.totalorder %s276, %s290
      %p292 = scmp.eq.s32.totalorder %s35, 0
      %p293 = por %p291, %p292
      %s295 = sadd.s32 %s294, 1
      %p298 = scmp.eq.s32.totalorder %s29, 1
      %p299 = scmp.ne.s32.totalorder %s294, %s296
      %p300 = scmp.eq.s32.totalorder %s29, 0
      %p301 = por %p299, %p300
      %p302 = scmp.ne.s32.totalorder %s294, %s296
      %p303 = scmp.eq.s32.totalorder %s34, 1
      %p304 = por %p302, %p303
      %p305 = scmp.ne.s32.totalorder %s296, %s297
      %p306 = scmp.eq.s32.totalorder %s34, 0
      %p307 = por %p305, %p306
      %p308 = scmp.ne.s32.totalorder %s296, %s297
      %p309 = scmp.eq.s32.totalorder %s35, 1
      %p310 = por %p308, %p309
      %p312 = scmp.ne.s32.totalorder %s297, %s311
      %p313 = scmp.eq.s32.totalorder %s35, 0
      %p314 = por %p312, %p313
      %s316 = sadd.s32 %s315, 1
      %p319 = scmp.eq.s32.totalorder %s29, 1
      %p320 = scmp.ne.s32.totalorder %s315, %s317
      %p321 = scmp.eq.s32.totalorder %s29, 0
      %p322 = por %p320, %p321
      %p323 = scmp.ne.s32.totalorder %s315, %s317
      %p324 = scmp.eq.s32.totalorder %s34, 1
      %p325 = por %p323, %p324
      %p326 = scmp.ne.s32.totalorder %s317, %s318
      %p327 = scmp.eq.s32.totalorder %s34, 0
      %p328 = por %p326, %p327
      %p329 = scmp.ne.s32.totalorder %s317, %s318
      %p330 = scmp.eq.s32.totalorder %s35, 1
      %p331 = por %p329, %p330
      %p333 = scmp.ne.s32.totalorder %s318, %s332
      %p334 = scmp.eq.s32.totalorder %s35, 0
      %p335 = por %p333, %p334
      %s337 = sadd.s32 %s336, 1
      %p340 = scmp.eq.s32.totalorder %s29, 1
      %p341 = scmp.ne.s32.totalorder %s336, %s338
      %p342 = scmp.eq.s32.totalorder %s29, 0
      %p343 = por %p341, %p342
      %p344 = scmp.ne.s32.totalorder %s336, %s338
      %p345 = scmp.eq.s32.totalorder %s34, 1
      %p346 = por %p344, %p345
      %p347 = scmp.ne.s32.totalorder %s338, %s339
      %p348 = scmp.eq.s32.totalorder %s34, 0
      %p349 = por %p347, %p348
      %p350 = scmp.ne.s32.totalorder %s338, %s339
      %p351 = scmp.eq.s32.totalorder %s35, 1
      %p352 = por %p350, %p351
      %p354 = scmp.ne.s32.totalorder %s339, %s353
      %p355 = scmp.eq.s32.totalorder %s35, 0
      %p356 = por %p354, %p355
      %s358 = sadd.s32 %s357, 1
      %p361 = scmp.eq.s32.totalorder %s29, 1
      %p362 = scmp.ne.s32.totalorder %s357, %s359
      %p363 = scmp.eq.s32.totalorder %s29, 0
      %p364 = por %p362, %p363
      %p365 = scmp.ne.s32.totalorder %s357, %s359
      %p366 = scmp.eq.s32.totalorder %s34, 1
      %p367 = por %p365, %p366
      %p368 = scmp.ne.s32.totalorder %s359, %s360
      %p369 = scmp.eq.s32.totalorder %s34, 0
      %p370 = por %p368, %p369
      %p371 = scmp.ne.s32.totalorder %s359, %s360
      %p372 = scmp.eq.s32.totalorder %s35, 1
      %p373 = por %p371, %p372
      %p375 = scmp.ne.s32.totalorder %s360, %s374
      %p376 = scmp.eq.s32.totalorder %s35, 0
      %p377 = por %p375, %p376
      %s379 = sadd.s32 %s378, 1
      %p382 = scmp.eq.s32.totalorder %s29, 1
      %p383 = scmp.ne.s32.totalorder %s378, %s380
      %p384 = scmp.eq.s32.totalorder %s29, 0
      %p385 = por %p383, %p384
      %p386 = scmp.ne.s32.totalorder %s378, %s380
      %p387 = scmp.eq.s32.totalorder %s34, 1
      %p388 = por %p386, %p387
      %p389 = scmp.ne.s32.totalorder %s380, %s381
      %p390 = scmp.eq.s32.totalorder %s34, 0
      %p391 = por %p389, %p390
      %p392 = scmp.ne.s32.totalorder %s380, %s381
      %p393 = scmp.eq.s32.totalorder %s35, 1
      %p394 = por %p392, %p393
      %p396 = scmp.ne.s32.totalorder %s381, %s395
      %p397 = scmp.eq.s32.totalorder %s35, 0
      %p398 = por %p396, %p397
      %s399 = ssub.s32 %s29, %s36
      %p400 = scmp.eq.s32.totalorder %s399, 0
      %s402 = sadd.s32 %s401, 1
      %s403 = scalar_select %p400, %s401, %s402
      %p406 = pneg %p400
      %p407 = scmp.eq.s32.totalorder %s29, 1
      %p408 = por %p406, %p407
      %p409 = scmp.ne.s32.totalorder %s401, %s404
      %p410 = scmp.eq.s32.totalorder %s29, 0
      %p411 = por %p409, %p410
      %p412 = scmp.ne.s32.totalorder %s401, %s404
      %p413 = scmp.eq.s32.totalorder %s34, 1
      %p414 = por %p412, %p413
      %p415 = scmp.ne.s32.totalorder %s404, %s405
      %p416 = scmp.eq.s32.totalorder %s34, 0
      %p417 = por %p415, %p416
      %p418 = scmp.ne.s32.totalorder %s404, %s405
      %p419 = scmp.eq.s32.totalorder %s35, 1
      %p420 = por %p418, %p419
      %p422 = scmp.ne.s32.totalorder %s405, %s421
      %p423 = scmp.eq.s32.totalorder %s35, 0
      %p424 = por %p422, %p423
      %p425 = scmp.le.s32.totalorder 1, %s29
      %p426 = scmp.lt.s32.totalorder %s29, 3
      %p427 = pnand %p425, %p426
      %p428 = pneg %p427
      // Predicated region
      $region9: #{tpu_custom_call.1} parent=5 // pred_check
        _
      $region10: #{tpu_custom_call.1} parent=5 // pred_check_branch
        %430 = sbr.rel (%p427) target = $region12
      $region11: #{tpu_custom_call.1} parent=5 // pred_region
        %s431 = ssub.s32 %s29, 1
        // Predicated region
        $region13: #{tpu_custom_call.1} parent=11 // pred_check
          %p432 = pneg %p76
        $region14: #{tpu_custom_call.1} parent=11 // pred_check_branch
          %434 = sbr.rel (%p432) target = $region16
        $region15: #{tpu_custom_call.1} parent=11 // pred_region
          _
        $region16: #{tpu_custom_call.1} parent=11 // pred_fallthru
          _
        // Predicated region
        $region17: #{tpu_custom_call.1} parent=11 // pred_check
          %p435 = pneg %p97
        $region18: #{tpu_custom_call.1} parent=11 // pred_check_branch
          %437 = sbr.rel (%p435) target = $region20
        $region19: #{tpu_custom_call.1} parent=11 // pred_region
          _
        $region20: #{tpu_custom_call.1} parent=11 // pred_fallthru
          _
        // Predicated region
        $region21: #{tpu_custom_call.1} parent=11 // pred_check
          %p438 = pneg %p118
        $region22: #{tpu_custom_call.1} parent=11 // pred_check_branch
          %440 = sbr.rel (%p438) target = $region24
        $region23: #{tpu_custom_call.1} parent=11 // pred_region
          _
        $region24: #{tpu_custom_call.1} parent=11 // pred_fallthru
          _
        // Predicated region
        $region25: #{tpu_custom_call.1} parent=11 // pred_check
          %p441 = pneg %p139
        $region26: #{tpu_custom_call.1} parent=11 // pred_check_branch
          %443 = sbr.rel (%p441) target = $region28
        $region27: #{tpu_custom_call.1} parent=11 // pred_region
          _
        $region28: #{tpu_custom_call.1} parent=11 // pred_fallthru
          _
        // Predicated region
        $region29: #{tpu_custom_call.1} parent=11 // pred_check
          %p444 = pneg %p160
        $region30: #{tpu_custom_call.1} parent=11 // pred_check_branch
          %446 = sbr.rel (%p444) target = $region32
        $region31: #{tpu_custom_call.1} parent=11 // pred_region
          _
        $region32: #{tpu_custom_call.1} parent=11 // pred_fallthru
          _
        // Predicated region
        $region33: #{tpu_custom_call.1} parent=11 // pred_check
          %p447 = pneg %p181
        $region34: #{tpu_custom_call.1} parent=11 // pred_check_branch
          %449 = sbr.rel (%p447) target = $region36
        $region35: #{tpu_custom_call.1} parent=11 // pred_region
          _
        $region36: #{tpu_custom_call.1} parent=11 // pred_fallthru
          _
        // Predicated region
        $region37: #{tpu_custom_call.1} parent=11 // pred_check
          %p450 = pneg %p202
        $region38: #{tpu_custom_call.1} parent=11 // pred_check_branch
          %452 = sbr.rel (%p450) target = $region40
        $region39: #{tpu_custom_call.1} parent=11 // pred_region
          _
        $region40: #{tpu_custom_call.1} parent=11 // pred_fallthru
          _
        // Predicated region
        $region41: #{tpu_custom_call.1} parent=11 // pred_check
          %p453 = pneg %p223
        $region42: #{tpu_custom_call.1} parent=11 // pred_check_branch
          %455 = sbr.rel (%p453) target = $region44
        $region43: #{tpu_custom_call.1} parent=11 // pred_region
          _
        $region44: #{tpu_custom_call.1} parent=11 // pred_fallthru
          _
        // Predicated region
        $region45: #{tpu_custom_call.1} parent=11 // pred_check
          %p456 = pneg %p244
        $region46: #{tpu_custom_call.1} parent=11 // pred_check_branch
          %458 = sbr.rel (%p456) target = $region48
        $region47: #{tpu_custom_call.1} parent=11 // pred_region
          _
        $region48: #{tpu_custom_call.1} parent=11 // pred_fallthru
          _
        // Predicated region
        $region49: #{tpu_custom_call.1} parent=11 // pred_check
          %p459 = pneg %p265
        $region50: #{tpu_custom_call.1} parent=11 // pred_check_branch
          %461 = sbr.rel (%p459) target = $region52
        $region51: #{tpu_custom_call.1} parent=11 // pred_region
          _
        $region52: #{tpu_custom_call.1} parent=11 // pred_fallthru
          _
        // Predicated region
        $region53: #{tpu_custom_call.1} parent=11 // pred_check
          %p462 = pneg %p286
        $region54: #{tpu_custom_call.1} parent=11 // pred_check_branch
          %464 = sbr.rel (%p462) target = $region56
        $region55: #{tpu_custom_call.1} parent=11 // pred_region
          _
        $region56: #{tpu_custom_call.1} parent=11 // pred_fallthru
          _
        // Predicated region
        $region57: #{tpu_custom_call.1} parent=11 // pred_check
          %p465 = pneg %p307
        $region58: #{tpu_custom_call.1} parent=11 // pred_check_branch
          %467 = sbr.rel (%p465) target = $region60
        $region59: #{tpu_custom_call.1} parent=11 // pred_region
          _
        $region60: #{tpu_custom_call.1} parent=11 // pred_fallthru
          _
        // Predicated region
        $region61: #{tpu_custom_call.1} parent=11 // pred_check
          %p468 = pneg %p328
        $region62: #{tpu_custom_call.1} parent=11 // pred_check_branch
          %470 = sbr.rel (%p468) target = $region64
        $region63: #{tpu_custom_call.1} parent=11 // pred_region
          _
        $region64: #{tpu_custom_call.1} parent=11 // pred_fallthru
          _
        // Predicated region
        $region65: #{tpu_custom_call.1} parent=11 // pred_check
          %p471 = pneg %p349
        $region66: #{tpu_custom_call.1} parent=11 // pred_check_branch
          %473 = sbr.rel (%p471) target = $region68
        $region67: #{tpu_custom_call.1} parent=11 // pred_region
          _
        $region68: #{tpu_custom_call.1} parent=11 // pred_fallthru
          _
        // Predicated region
        $region69: #{tpu_custom_call.1} parent=11 // pred_check
          %p474 = pneg %p370
        $region70: #{tpu_custom_call.1} parent=11 // pred_check_branch
          %476 = sbr.rel (%p474) target = $region72
        $region71: #{tpu_custom_call.1} parent=11 // pred_region
          _
        $region72: #{tpu_custom_call.1} parent=11 // pred_fallthru
          _
        // Predicated region
        $region73: #{tpu_custom_call.1} parent=11 // pred_check
          %p477 = pneg %p391
        $region74: #{tpu_custom_call.1} parent=11 // pred_check_branch
          %479 = sbr.rel (%p477) target = $region76
        $region75: #{tpu_custom_call.1} parent=11 // pred_region
          _
        $region76: #{tpu_custom_call.1} parent=11 // pred_fallthru
          _
      $region12: #{tpu_custom_call.1} parent=5 // pred_fallthru
        _
      %p480 = scmp.lt.s32.totalorder %s29, 2
      // Predicated region
      $region77: #{tpu_custom_call.1} parent=5 // pred_check
        %p481 = pneg %p480
      $region78: #{tpu_custom_call.1} parent=5 // pred_check_branch
        %483 = sbr.rel (%p481) target = $region80
      $region79: #{tpu_custom_call.1} parent=5 // pred_region
        // Predicated region
        $region81: #{tpu_custom_call.1} parent=79 // pred_check
          %p484 = pneg %p49
        $region82: #{tpu_custom_call.1} parent=79 // pred_check_branch
          %486 = sbr.rel (%p484) target = $region84
        $region83: #{tpu_custom_call.1} parent=79 // pred_region
          %s487 = sand.u32 %s39, 1
          %s488 = scalar_lea.sflag [#allocation3], %s487
          %s489 = sand.u32 %s39, 1
          %s490 = smul.addr %s489, 8
          %s491 = scalar_lea.vmem [#allocation2], %s490
          %s493 = ssub.s32 128, 128
          %494 = vsyncadd %s488, %s493
          %s495 = smul.addr %s29, 128
          %s496 = scalar_lea.hbm %s0, %s495
          %s498 = sshll.u32 %s491, 4
          %s499 = int_to_ptr.vmem [resolvable:$true] %s498
          %501 = dma.hbm_to_vmem [thread:$0]  %s496, 128, %s499, %s488
        $region84: #{tpu_custom_call.1} parent=79 // pred_fallthru
          _
      $region80: #{tpu_custom_call.1} parent=5 // pred_fallthru
        _
      %p502 = scmp.le.s32.totalorder 1, %s29
      %p503 = scmp.lt.s32.totalorder %s29, 3
      %p504 = pnand %p502, %p503
      %p505 = pneg %p504
      // Predicated region
      $region85: #{tpu_custom_call.1} parent=5 // pred_check
        _
      $region86: #{tpu_custom_call.1} parent=5 // pred_check_branch
        %507 = sbr.rel (%p504) target = $region88
      $region87: #{tpu_custom_call.1} parent=5 // pred_region
        %s508 = ssub.s32 %s29, 1
        %s509 = sand.u32 %s42, 1
        %s510 = scalar_lea.sflag [#allocation3], %s509
        %s511 = sand.u32 %s42, 1
        %s512 = smul.addr %s511, 8
        %s513 = scalar_lea.vmem [#allocation2], %s512
        // Predicated region
        $region89: #{tpu_custom_call.1} parent=87 // pred_check
          %p514 = pneg %p55
        $region90: #{tpu_custom_call.1} parent=87 // pred_check_branch
          %516 = sbr.rel (%p514) target = $region92
        $region91: #{tpu_custom_call.1} parent=87 // pred_region
          %517 = dma.done %s510, 128
        $region92: #{tpu_custom_call.1} parent=87 // pred_fallthru
          _
        %s518 = sand.u32 %s42, 1
        %s519 = scalar_lea.sflag [#allocation3], %s518
        %s520 = sand.u32 %s42, 1
        %s521 = smul.addr %s520, 8
        %s522 = scalar_lea.vmem [#allocation2], %s521
        %p523 = pneg %p55
        %p524 = pneg %p52
        %p525 = pneg %p76
        %p526 = pneg %p73
        %p527 = pneg %p97
        %p528 = pneg %p94
        %p529 = pneg %p118
        %p530 = pneg %p115
        %p531 = pneg %p139
        %p532 = pneg %p136
        %p533 = pneg %p160
        %p534 = pneg %p157
        %p535 = pneg %p181
        %p536 = pneg %p178
        %p537 = pneg %p202
        %p538 = pneg %p199
        %p539 = pneg %p223
        %p540 = pneg %p220
        %p541 = pneg %p244
        %p542 = pneg %p241
        %p543 = pneg %p265
        %p544 = pneg %p262
        %p545 = pneg %p286
        %p546 = pneg %p283
        %p547 = pneg %p307
        %p548 = pneg %p304
        %p549 = pneg %p328
        %p550 = pneg %p325
        %p551 = pneg %p349
        %p552 = pneg %p346
        %p553 = pneg %p370
        %p554 = pneg %p367
        %p555 = pneg %p391
        %p556 = pneg %p388
        %p557 = pneg %p417
        %p558 = pneg %p414
        %s559 = sand.u32 %s404, 1
        %s560 = scalar_lea.sflag [#allocation4], %s559
        %s561 = sand.u32 %s404, 1
        %s562 = smul.addr %s561, 8
        %s563 = scalar_lea.vmem [#allocation5], %s562
        %v564 = vld [vmem:[%s513] sm:$0xff]
        %v565 = vld [vmem:[%s1] sm:$0xff]
        %v566 = vld [vmem:[%s1 + $0x8] sm:$0xff]
        %v567 = vld [vmem:[%s1 + $0x10] sm:$0xff]
        %v568 = vld [vmem:[%s1 + $0x18] sm:$0xff]
        %v569 = vld [vmem:[%s2] sm:$0x1]
        %v571 = vlaneseq
        %v572 = vshrl.u32 %v571, 7
        %v573 = vsub.s32 0, %v572
        %v574 = vrot.slane %v569, %v573
        %vm576 = vcmask 261120
        %v578 = vsel %vm576, %v564, 0
        %580 = vmatprep.subr.mxu0 0.0
        %581 = vmatpush1.msra.mxu0 %v565
        %582 = vmatprep.subr.mxu0 0.0
        %583 = vmatpush1.msra.mxu0 %v566
        %584 = vmatprep.subr.mxu0 0.0
        %585 = vmatpush1.msra.mxu0 %v567
        %586 = vmatprep.subr.mxu0 0.0
        %587 = vmatpush1.msra.mxu0 %v568
        %588 = vmatprep.subr.mxu0 0.0
        %589 = vmatpush1.msra.mxu0 0.0
        %590 = vmatprep.subr.mxu0 0.0
        %591 = vmatpush1.msra.mxu0 0.0
        %592 = vmatprep.subr.mxu0 0.0
        %593 = vmatpush1.msra.mxu0 0.0
        %594 = vmatprep.subr.mxu0 0.0
        %595 = vmatpush1.msra.mxu0 0.0
        %596 = vmatprep.subr.mxu0 0.0
        %597 = vmatpush1.msra.mxu0 0.0
        %598 = vmatprep.subr.mxu0 0.0
        %599 = vmatpush1.msra.mxu0 0.0
        %600 = vmatprep.subr.mxu0 0.0
        %601 = vmatpush1.msra.mxu0 0.0
        %602 = vmatprep.subr.mxu0 0.0
        %603 = vmatpush1.msra.mxu0 0.0
        %604 = vmatprep.subr.mxu0 0.0
        %605 = vmatpush1.msra.mxu0 0.0
        %606 = vmatprep.subr.mxu0 0.0
        %607 = vmatpush1.msra.mxu0 0.0
        %608 = vmatprep.subr.mxu0 0.0
        %609 = vmatpush1.msra.mxu0 0.0
        %610 = vmatprep.subr.mxu0 0.0
        %611 = vmatpush1.msra.mxu0 0.0
        %612 = vmatprep.subr.mxu0 0.0
        %613 = vmatpush1.msra.mxu0 0.0
        %614 = vmatprep.subr.mxu0 0.0
        %615 = vmatpush1.msra.mxu0 0.0
        %616 = vmatprep.subr.mxu0 0.0
        %617 = vmatpush1.msra.mxu0 0.0
        %618 = vmatprep.subr.mxu0 0.0
        %619 = vmatpush1.msra.mxu0 0.0
        %620 = vmatprep.subr.mxu0 0.0
        %621 = vmatpush1.msra.mxu0 0.0
        %622 = vmatprep.subr.mxu0 0.0
        %623 = vmatpush1.msra.mxu0 0.0
        %624 = vmatprep.subr.mxu0 0.0
        %625 = vmatpush1.msra.mxu0 0.0
        %626 = vmatprep.subr.mxu0 0.0
        %627 = vmatpush1.msra.mxu0 0.0
        %628 = vmatprep.subr.mxu0 0.0
        %629 = vmatpush1.msra.mxu0 0.0
        %630 = vmatprep.subr.mxu0 0.0
        %631 = vmatpush1.msra.mxu0 0.0
        %632 = vmatprep.subr.mxu0 0.0
        %633 = vmatpush1.msra.mxu0 0.0
        %634 = vmatprep.subr.mxu0 0.0
        %635 = vmatpush1.msra.mxu0 0.0
        %636 = vmatprep.subr.mxu0 0.0
        %637 = vmatpush1.msra.mxu0 0.0
        %638 = vmatprep.subr.mxu0 0.0
        %639 = vmatpush1.msra.mxu0 0.0
        %640 = vmatprep.subr.mxu0 0.0
        %641 = vmatpush1.msra.mxu0 0.0
        %642 = vmatprep.subr.mxu0 0.0
        %643 = vmatpush1.msra.mxu0 0.0
        %644 = vmatprep.mubr.f32.mxu0 0.0
        %645 = vmatmul.mubr.f32.gmra.mrb[0].mxu0 %v578
        %v646 = vpop.f32.mrb[0].mxu0
        %v647 = vadd.f32 %v574, %v646
        %v648 = vpop.f32.mrb[0].mxu0
        %649 = vdwg.mxu0
        %v650 = vld [vmem:[%s3] sm:$0xff]
        %v651 = vld [vmem:[%s3 + $0x8] sm:$0xff]
        %v652 = vld [vmem:[%s3 + $0x10] sm:$0xff]
        %v653 = vld [vmem:[%s3 + $0x18] sm:$0xff]
        %v654 = vld [vmem:[%s4] sm:$0x1]
        %v656 = vlaneseq
        %v657 = vshrl.u32 %v656, 7
        %v658 = vsub.s32 0, %v657
        %v659 = vrot.slane %v654, %v658
        %661 = vmatprep.subr.mxu0 0.0
        %662 = vmatpush1.msra.mxu0 %v650
        %663 = vmatprep.subr.mxu0 0.0
        %664 = vmatpush1.msra.mxu0 %v651
        %665 = vmatprep.subr.mxu0 0.0
        %666 = vmatpush1.msra.mxu0 %v652
        %667 = vmatprep.subr.mxu0 0.0
        %668 = vmatpush1.msra.mxu0 %v653
        %669 = vmatprep.subr.mxu0 0.0
        %670 = vmatpush1.msra.mxu0 0.0
        %671 = vmatprep.subr.mxu0 0.0
        %672 = vmatpush1.msra.mxu0 0.0
        %673 = vmatprep.subr.mxu0 0.0
        %674 = vmatpush1.msra.mxu0 0.0
        %675 = vmatprep.subr.mxu0 0.0
        %676 = vmatpush1.msra.mxu0 0.0
        %677 = vmatprep.subr.mxu0 0.0
        %678 = vmatpush1.msra.mxu0 0.0
        %679 = vmatprep.subr.mxu0 0.0
        %680 = vmatpush1.msra.mxu0 0.0
        %681 = vmatprep.subr.mxu0 0.0
        %682 = vmatpush1.msra.mxu0 0.0
        %683 = vmatprep.subr.mxu0 0.0
        %684 = vmatpush1.msra.mxu0 0.0
        %685 = vmatprep.subr.mxu0 0.0
        %686 = vmatpush1.msra.mxu0 0.0
        %687 = vmatprep.subr.mxu0 0.0
        %688 = vmatpush1.msra.mxu0 0.0
        %689 = vmatprep.subr.mxu0 0.0
        %690 = vmatpush1.msra.mxu0 0.0
        %691 = vmatprep.subr.mxu0 0.0
        %692 = vmatpush1.msra.mxu0 0.0
        %693 = vmatprep.subr.mxu0 0.0
        %694 = vmatpush1.msra.mxu0 0.0
        %695 = vmatprep.subr.mxu0 0.0
        %696 = vmatpush1.msra.mxu0 0.0
        %697 = vmatprep.subr.mxu0 0.0
        %698 = vmatpush1.msra.mxu0 0.0
        %699 = vmatprep.subr.mxu0 0.0
        %700 = vmatpush1.msra.mxu0 0.0
        %701 = vmatprep.subr.mxu0 0.0
        %702 = vmatpush1.msra.mxu0 0.0
        %703 = vmatprep.subr.mxu0 0.0
        %704 = vmatpush1.msra.mxu0 0.0
        %705 = vmatprep.subr.mxu0 0.0
        %706 = vmatpush1.msra.mxu0 0.0
        %707 = vmatprep.subr.mxu0 0.0
        %708 = vmatpush1.msra.mxu0 0.0
        %709 = vmatprep.subr.mxu0 0.0
        %710 = vmatpush1.msra.mxu0 0.0
        %711 = vmatprep.subr.mxu0 0.0
        %712 = vmatpush1.msra.mxu0 0.0
        %713 = vmatprep.subr.mxu0 0.0
        %714 = vmatpush1.msra.mxu0 0.0
        %715 = vmatprep.subr.mxu0 0.0
        %716 = vmatpush1.msra.mxu0 0.0
        %717 = vmatprep.subr.mxu0 0.0
        %718 = vmatpush1.msra.mxu0 0.0
        %719 = vmatprep.subr.mxu0 0.0
        %720 = vmatpush1.msra.mxu0 0.0
        %721 = vmatprep.subr.mxu0 0.0
        %722 = vmatpush1.msra.mxu0 0.0
        %723 = vmatprep.subr.mxu0 0.0
        %724 = vmatpush1.msra.mxu0 0.0
        %725 = vmatprep.mubr.f32.mxu0 0.0
        %726 = vmatmul.mubr.f32.gmra.mrb[0].mxu0 %v578
        %v727 = vpop.f32.mrb[0].mxu0
        %v728 = vadd.f32 %v659, %v727
        %v729 = vpop.f32.mrb[0].mxu0
        %730 = vdwg.mxu0
        %v731 = vld [vmem:[%s5] sm:$0xff]
        %v732 = vld [vmem:[%s5 + $0x8] sm:$0xff]
        %v733 = vld [vmem:[%s5 + $0x10] sm:$0xff]
        %v734 = vld [vmem:[%s5 + $0x18] sm:$0xff]
        %v735 = vld [vmem:[%s6] sm:$0x1]
        %v737 = vlaneseq
        %v738 = vshrl.u32 %v737, 7
        %v739 = vsub.s32 0, %v738
        %v740 = vrot.slane %v735, %v739
        %742 = vmatprep.subr.mxu0 0.0
        %743 = vmatpush1.msra.mxu0 %v731
        %744 = vmatprep.subr.mxu0 0.0
        %745 = vmatpush1.msra.mxu0 %v732
        %746 = vmatprep.subr.mxu0 0.0
        %747 = vmatpush1.msra.mxu0 %v733
        %748 = vmatprep.subr.mxu0 0.0
        %749 = vmatpush1.msra.mxu0 %v734
        %750 = vmatprep.subr.mxu0 0.0
        %751 = vmatpush1.msra.mxu0 0.0
        %752 = vmatprep.subr.mxu0 0.0
        %753 = vmatpush1.msra.mxu0 0.0
        %754 = vmatprep.subr.mxu0 0.0
        %755 = vmatpush1.msra.mxu0 0.0
        %756 = vmatprep.subr.mxu0 0.0
        %757 = vmatpush1.msra.mxu0 0.0
        %758 = vmatprep.subr.mxu0 0.0
        %759 = vmatpush1.msra.mxu0 0.0
        %760 = vmatprep.subr.mxu0 0.0
        %761 = vmatpush1.msra.mxu0 0.0
        %762 = vmatprep.subr.mxu0 0.0
        %763 = vmatpush1.msra.mxu0 0.0
        %764 = vmatprep.subr.mxu0 0.0
        %765 = vmatpush1.msra.mxu0 0.0
        %766 = vmatprep.subr.mxu0 0.0
        %767 = vmatpush1.msra.mxu0 0.0
        %768 = vmatprep.subr.mxu0 0.0
        %769 = vmatpush1.msra.mxu0 0.0
        %770 = vmatprep.subr.mxu0 0.0
        %771 = vmatpush1.msra.mxu0 0.0
        %772 = vmatprep.subr.mxu0 0.0
        %773 = vmatpush1.msra.mxu0 0.0
        %774 = vmatprep.subr.mxu0 0.0
        %775 = vmatpush1.msra.mxu0 0.0
        %776 = vmatprep.subr.mxu0 0.0
        %777 = vmatpush1.msra.mxu0 0.0
        %778 = vmatprep.subr.mxu0 0.0
        %779 = vmatpush1.msra.mxu0 0.0
        %780 = vmatprep.subr.mxu0 0.0
        %781 = vmatpush1.msra.mxu0 0.0
        %782 = vmatprep.subr.mxu0 0.0
        %783 = vmatpush1.msra.mxu0 0.0
        %784 = vmatprep.subr.mxu0 0.0
        %785 = vmatpush1.msra.mxu0 0.0
        %786 = vmatprep.subr.mxu0 0.0
        %787 = vmatpush1.msra.mxu0 0.0
        %788 = vmatprep.subr.mxu0 0.0
        %789 = vmatpush1.msra.mxu0 0.0
        %790 = vmatprep.subr.mxu0 0.0
        %791 = vmatpush1.msra.mxu0 0.0
        %792 = vmatprep.subr.mxu0 0.0
        %793 = vmatpush1.msra.mxu0 0.0
        %794 = vmatprep.subr.mxu0 0.0
        %795 = vmatpush1.msra.mxu0 0.0
        %796 = vmatprep.subr.mxu0 0.0
        %797 = vmatpush1.msra.mxu0 0.0
        %798 = vmatprep.subr.mxu0 0.0
        %799 = vmatpush1.msra.mxu0 0.0
        %800 = vmatprep.subr.mxu0 0.0
        %801 = vmatpush1.msra.mxu0 0.0
        %802 = vmatprep.subr.mxu0 0.0
        %803 = vmatpush1.msra.mxu0 0.0
        %804 = vmatprep.subr.mxu0 0.0
        %805 = vmatpush1.msra.mxu0 0.0
        %806 = vmatprep.mubr.f32.mxu0 0.0
        %807 = vmatmul.mubr.f32.gmra.mrb[0].mxu0 %v578
        %v808 = vpop.f32.mrb[0].mxu0
        %v809 = vadd.f32 %v740, %v808
        %v810 = vpop.f32.mrb[0].mxu0
        %811 = vdwg.mxu0
        %vm812 = vcmask 64512
        %v814 = vsel %vm812, %v647, 0
        %v817 = vsel %vm812, %v728, 0
        %819 = vmatprep.subr.mxu0 0.0
        %820 = vmatpush1.xpose.msra.mxu0 %v817
        %821 = vmatprep.subr.mxu0 0.0
        %822 = vmatpush1.xpose.msra.mxu0 0.0
        %823 = vmatprep.subr.mxu0 0.0
        %824 = vmatpush1.xpose.msra.mxu0 0.0
        %825 = vmatprep.subr.mxu0 0.0
        %826 = vmatpush1.xpose.msra.mxu0 0.0
        %827 = vmatprep.subr.mxu0 0.0
        %828 = vmatpush1.xpose.msra.mxu0 0.0
        %829 = vmatprep.subr.mxu0 0.0
        %830 = vmatpush1.xpose.msra.mxu0 0.0
        %831 = vmatprep.subr.mxu0 0.0
        %832 = vmatpush1.xpose.msra.mxu0 0.0
        %833 = vmatprep.subr.mxu0 0.0
        %834 = vmatpush1.xpose.msra.mxu0 0.0
        %835 = vmatprep.subr.mxu0 0.0
        %836 = vmatpush1.xpose.msra.mxu0 0.0
        %837 = vmatprep.subr.mxu0 0.0
        %838 = vmatpush1.xpose.msra.mxu0 0.0
        %839 = vmatprep.subr.mxu0 0.0
        %840 = vmatpush1.xpose.msra.mxu0 0.0
        %841 = vmatprep.subr.mxu0 0.0
        %842 = vmatpush1.xpose.msra.mxu0 0.0
        %843 = vmatprep.subr.mxu0 0.0
        %844 = vmatpush1.xpose.msra.mxu0 0.0
        %845 = vmatprep.subr.mxu0 0.0
        %846 = vmatpush1.xpose.msra.mxu0 0.0
        %847 = vmatprep.subr.mxu0 0.0
        %848 = vmatpush1.xpose.msra.mxu0 0.0
        %849 = vmatprep.subr.mxu0 0.0
        %850 = vmatpush1.xpose.msra.mxu0 0.0
        %851 = vmatprep.subr.mxu0 0.0
        %852 = vmatpush1.xpose.msra.mxu0 0.0
        %853 = vmatprep.subr.mxu0 0.0
        %854 = vmatpush1.xpose.msra.mxu0 0.0
        %855 = vmatprep.subr.mxu0 0.0
        %856 = vmatpush1.xpose.msra.mxu0 0.0
        %857 = vmatprep.subr.mxu0 0.0
        %858 = vmatpush1.xpose.msra.mxu0 0.0
        %859 = vmatprep.subr.mxu0 0.0
        %860 = vmatpush1.xpose.msra.mxu0 0.0
        %861 = vmatprep.subr.mxu0 0.0
        %862 = vmatpush1.xpose.msra.mxu0 0.0
        %863 = vmatprep.subr.mxu0 0.0
        %864 = vmatpush1.xpose.msra.mxu0 0.0
        %865 = vmatprep.subr.mxu0 0.0
        %866 = vmatpush1.xpose.msra.mxu0 0.0
        %867 = vmatprep.subr.mxu0 0.0
        %868 = vmatpush1.xpose.msra.mxu0 0.0
        %869 = vmatprep.subr.mxu0 0.0
        %870 = vmatpush1.xpose.msra.mxu0 0.0
        %871 = vmatprep.subr.mxu0 0.0
        %872 = vmatpush1.xpose.msra.mxu0 0.0
        %873 = vmatprep.subr.mxu0 0.0
        %874 = vmatpush1.xpose.msra.mxu0 0.0
        %875 = vmatprep.subr.mxu0 0.0
        %876 = vmatpush1.xpose.msra.mxu0 0.0
        %877 = vmatprep.subr.mxu0 0.0
        %878 = vmatpush1.xpose.msra.mxu0 0.0
        %879 = vmatprep.subr.mxu0 0.0
        %880 = vmatpush1.xpose.msra.mxu0 0.0
        %881 = vmatprep.subr.mxu0 0.0
        %882 = vmatpush1.xpose.msra.mxu0 0.0
        %883 = vmatprep.mubr.f32.mxu0 0.0
        %884 = vmatmul.mubr.f32.gmra.mrb[0].mxu0 %v814
        %v885 = vpop.f32.mrb[0].mxu0
        %v886 = vadd.f32 0.0, %v885
        %v887 = vpop.f32.mrb[0].mxu0
        %888 = vdwg.mxu0
        %v889 = vmul.f32 %v886, 0.35355338
        %v890 = vsel %vm812, %v889, -inf
        %891 = vmax.xlane.f32.xlu0 %v890
        %v892 = vpop.xlane.xlu0 %891
        %v893 = vsub.f32 %v889, %v892
        %v894 = vmul.f32 %v893, 1.442695
        %v895 = vpow.pop %v894
        %v896 = vsel %vm812, %v895, 0.0
        %897 = vadd.xlane.f32.xlu0 %v896
        %v898 = vpop.xlane.xlu0 %897
        %v899 = vrcp.pop %v898
        %v900 = vmul.f32 %v895, %v899
        %v902 = vsel %vm812, %v900, 0
        %904 = vmatprep.subr.mxu0 0.0
        %905 = vmatpush1.msra.mxu0 %v809
        %906 = vmatprep.subr.mxu0 0.0
        %907 = vmatpush1.msra.mxu0 0.0
        %908 = vmatprep.subr.mxu0 0.0
        %909 = vmatpush1.msra.mxu0 0.0
        %910 = vmatprep.subr.mxu0 0.0
        %911 = vmatpush1.msra.mxu0 0.0
        %912 = vmatprep.subr.mxu0 0.0
        %913 = vmatpush1.msra.mxu0 0.0
        %914 = vmatprep.subr.mxu0 0.0
        %915 = vmatpush1.msra.mxu0 0.0
        %916 = vmatprep.subr.mxu0 0.0
        %917 = vmatpush1.msra.mxu0 0.0
        %918 = vmatprep.subr.mxu0 0.0
        %919 = vmatpush1.msra.mxu0 0.0
        %920 = vmatprep.subr.mxu0 0.0
        %921 = vmatpush1.msra.mxu0 0.0
        %922 = vmatprep.subr.mxu0 0.0
        %923 = vmatpush1.msra.mxu0 0.0
        %924 = vmatprep.subr.mxu0 0.0
        %925 = vmatpush1.msra.mxu0 0.0
        %926 = vmatprep.subr.mxu0 0.0
        %927 = vmatpush1.msra.mxu0 0.0
        %928 = vmatprep.subr.mxu0 0.0
        %929 = vmatpush1.msra.mxu0 0.0
        %930 = vmatprep.subr.mxu0 0.0
        %931 = vmatpush1.msra.mxu0 0.0
        %932 = vmatprep.subr.mxu0 0.0
        %933 = vmatpush1.msra.mxu0 0.0
        %934 = vmatprep.subr.mxu0 0.0
        %935 = vmatpush1.msra.mxu0 0.0
        %936 = vmatprep.subr.mxu0 0.0
        %937 = vmatpush1.msra.mxu0 0.0
        %938 = vmatprep.subr.mxu0 0.0
        %939 = vmatpush1.msra.mxu0 0.0
        %940 = vmatprep.subr.mxu0 0.0
        %941 = vmatpush1.msra.mxu0 0.0
        %942 = vmatprep.subr.mxu0 0.0
        %943 = vmatpush1.msra.mxu0 0.0
        %944 = vmatprep.subr.mxu0 0.0
        %945 = vmatpush1.msra.mxu0 0.0
        %946 = vmatprep.subr.mxu0 0.0
        %947 = vmatpush1.msra.mxu0 0.0
        %948 = vmatprep.subr.mxu0 0.0
        %949 = vmatpush1.msra.mxu0 0.0
        %950 = vmatprep.subr.mxu0 0.0
        %951 = vmatpush1.msra.mxu0 0.0
        %952 = vmatprep.subr.mxu0 0.0
        %953 = vmatpush1.msra.mxu0 0.0
        %954 = vmatprep.subr.mxu0 0.0
        %955 = vmatpush1.msra.mxu0 0.0
        %956 = vmatprep.subr.mxu0 0.0
        %957 = vmatpush1.msra.mxu0 0.0
        %958 = vmatprep.subr.mxu0 0.0
        %959 = vmatpush1.msra.mxu0 0.0
        %960 = vmatprep.subr.mxu0 0.0
        %961 = vmatpush1.msra.mxu0 0.0
        %962 = vmatprep.subr.mxu0 0.0
        %963 = vmatpush1.msra.mxu0 0.0
        %964 = vmatprep.subr.mxu0 0.0
        %965 = vmatpush1.msra.mxu0 0.0
        %966 = vmatprep.subr.mxu0 0.0
        %967 = vmatpush1.msra.mxu0 0.0
        %968 = vmatprep.mubr.f32.mxu0 0.0
        %969 = vmatmul.mubr.f32.gmra.mrb[0].mxu0 %v902
        %v970 = vpop.f32.mrb[0].mxu0
        %v971 = vadd.f32 0.0, %v970
        %v972 = vpop.f32.mrb[0].mxu0
        %973 = vdwg.mxu0
        %v974 = vld [vmem:[%s7] sm:$0xff]
        %975 = vrot.lane.b32.xlu0 %v647, 120
        %v976 = vpop.permute.xlu0 %975
        %977 = vrot.lane.b32.xlu0 %v728, 120
        %v978 = vpop.permute.xlu0 %977
        %v979 = vsel %vm812, %v976, 0
        %v981 = vsel %vm812, %v978, 0
        %983 = vmatprep.subr.mxu0 0.0
        %984 = vmatpush1.xpose.msra.mxu0 %v981
        %985 = vmatprep.subr.mxu0 0.0
        %986 = vmatpush1.xpose.msra.mxu0 0.0
        %987 = vmatprep.subr.mxu0 0.0
        %988 = vmatpush1.xpose.msra.mxu0 0.0
        %989 = vmatprep.subr.mxu0 0.0
        %990 = vmatpush1.xpose.msra.mxu0 0.0
        %991 = vmatprep.subr.mxu0 0.0
        %992 = vmatpush1.xpose.msra.mxu0 0.0
        %993 = vmatprep.subr.mxu0 0.0
        %994 = vmatpush1.xpose.msra.mxu0 0.0
        %995 = vmatprep.subr.mxu0 0.0
        %996 = vmatpush1.xpose.msra.mxu0 0.0
        %997 = vmatprep.subr.mxu0 0.0
        %998 = vmatpush1.xpose.msra.mxu0 0.0
        %999 = vmatprep.subr.mxu0 0.0
        %1000 = vmatpush1.xpose.msra.mxu0 0.0
        %1001 = vmatprep.subr.mxu0 0.0
        %1002 = vmatpush1.xpose.msra.mxu0 0.0
        %1003 = vmatprep.subr.mxu0 0.0
        %1004 = vmatpush1.xpose.msra.mxu0 0.0
        %1005 = vmatprep.subr.mxu0 0.0
        %1006 = vmatpush1.xpose.msra.mxu0 0.0
        %1007 = vmatprep.subr.mxu0 0.0
        %1008 = vmatpush1.xpose.msra.mxu0 0.0
        %1009 = vmatprep.subr.mxu0 0.0
        %1010 = vmatpush1.xpose.msra.mxu0 0.0
        %1011 = vmatprep.subr.mxu0 0.0
        %1012 = vmatpush1.xpose.msra.mxu0 0.0
        %1013 = vmatprep.subr.mxu0 0.0
        %1014 = vmatpush1.xpose.msra.mxu0 0.0
        %1015 = vmatprep.subr.mxu0 0.0
        %1016 = vmatpush1.xpose.msra.mxu0 0.0
        %1017 = vmatprep.subr.mxu0 0.0
        %1018 = vmatpush1.xpose.msra.mxu0 0.0
        %1019 = vmatprep.subr.mxu0 0.0
        %1020 = vmatpush1.xpose.msra.mxu0 0.0
        %1021 = vmatprep.subr.mxu0 0.0
        %1022 = vmatpush1.xpose.msra.mxu0 0.0
        %1023 = vmatprep.subr.mxu0 0.0
        %1024 = vmatpush1.xpose.msra.mxu0 0.0
        %1025 = vmatprep.subr.mxu0 0.0
        %1026 = vmatpush1.xpose.msra.mxu0 0.0
        %1027 = vmatprep.subr.mxu0 0.0
        %1028 = vmatpush1.xpose.msra.mxu0 0.0
        %1029 = vmatprep.subr.mxu0 0.0
        %1030 = vmatpush1.xpose.msra.mxu0 0.0
        %1031 = vmatprep.subr.mxu0 0.0
        %1032 = vmatpush1.xpose.msra.mxu0 0.0
        %1033 = vmatprep.subr.mxu0 0.0
        %1034 = vmatpush1.xpose.msra.mxu0 0.0
        %1035 = vmatprep.subr.mxu0 0.0
        %1036 = vmatpush1.xpose.msra.mxu0 0.0
        %1037 = vmatprep.subr.mxu0 0.0
        %1038 = vmatpush1.xpose.msra.mxu0 0.0
        %1039 = vmatprep.subr.mxu0 0.0
        %1040 = vmatpush1.xpose.msra.mxu0 0.0
        %1041 = vmatprep.subr.mxu0 0.0
        %1042 = vmatpush1.xpose.msra.mxu0 0.0
        %1043 = vmatprep.subr.mxu0 0.0
        %1044 = vmatpush1.xpose.msra.mxu0 0.0
        %1045 = vmatprep.subr.mxu0 0.0
        %1046 = vmatpush1.xpose.msra.mxu0 0.0
        %1047 = vmatprep.mubr.f32.mxu0 0.0
        %1048 = vmatmul.mubr.f32.gmra.mrb[0].mxu0 %v979
        %v1049 = vpop.f32.mrb[0].mxu0
        %v1050 = vadd.f32 0.0, %v1049
        %v1051 = vpop.f32.mrb[0].mxu0
        %1052 = vdwg.mxu0
        %v1053 = vmul.f32 %v1050, 0.35355338
        %v1054 = vsel %vm812, %v1053, -inf
        %1055 = vmax.xlane.f32.xlu0 %v1054
        %v1056 = vpop.xlane.xlu0 %1055
        %v1057 = vsub.f32 %v1053, %v1056
        %v1058 = vmul.f32 %v1057, 1.442695
        %v1059 = vpow.pop %v1058
        %v1060 = vsel %vm812, %v1059, 0.0
        %1061 = vadd.xlane.f32.xlu0 %v1060
        %v1062 = vpop.xlane.xlu0 %1061
        %v1063 = vrcp.pop %v1062
        %v1064 = vmul.f32 %v1059, %v1063
        %1066 = vrot.lane.b32.xlu0 %v809, 120
        %v1067 = vpop.permute.xlu0 %1066
        %v1070 = vsel %vm812, %v1064, 0
        %1072 = vmatprep.subr.mxu0 0.0
        %1073 = vmatpush1.msra.mxu0 %v1067
        %1074 = vmatprep.subr.mxu0 0.0
        %1075 = vmatpush1.msra.mxu0 0.0
        %1076 = vmatprep.subr.mxu0 0.0
        %1077 = vmatpush1.msra.mxu0 0.0
        %1078 = vmatprep.subr.mxu0 0.0
        %1079 = vmatpush1.msra.mxu0 0.0
        %1080 = vmatprep.subr.mxu0 0.0
        %1081 = vmatpush1.msra.mxu0 0.0
        %1082 = vmatprep.subr.mxu0 0.0
        %1083 = vmatpush1.msra.mxu0 0.0
        %1084 = vmatprep.subr.mxu0 0.0
        %1085 = vmatpush1.msra.mxu0 0.0
        %1086 = vmatprep.subr.mxu0 0.0
        %1087 = vmatpush1.msra.mxu0 0.0
        %1088 = vmatprep.subr.mxu0 0.0
        %1089 = vmatpush1.msra.mxu0 0.0
        %1090 = vmatprep.subr.mxu0 0.0
        %1091 = vmatpush1.msra.mxu0 0.0
        %1092 = vmatprep.subr.mxu0 0.0
        %1093 = vmatpush1.msra.mxu0 0.0
        %1094 = vmatprep.subr.mxu0 0.0
        %1095 = vmatpush1.msra.mxu0 0.0
        %1096 = vmatprep.subr.mxu0 0.0
        %1097 = vmatpush1.msra.mxu0 0.0
        %1098 = vmatprep.subr.mxu0 0.0
        %1099 = vmatpush1.msra.mxu0 0.0
        %1100 = vmatprep.subr.mxu0 0.0
        %1101 = vmatpush1.msra.mxu0 0.0
        %1102 = vmatprep.subr.mxu0 0.0
        %1103 = vmatpush1.msra.mxu0 0.0
        %1104 = vmatprep.subr.mxu0 0.0
        %1105 = vmatpush1.msra.mxu0 0.0
        %1106 = vmatprep.subr.mxu0 0.0
        %1107 = vmatpush1.msra.mxu0 0.0
        %1108 = vmatprep.subr.mxu0 0.0
        %1109 = vmatpush1.msra.mxu0 0.0
        %1110 = vmatprep.subr.mxu0 0.0
        %1111 = vmatpush1.msra.mxu0 0.0
        %1112 = vmatprep.subr.mxu0 0.0
        %1113 = vmatpush1.msra.mxu0 0.0
        %1114 = vmatprep.subr.mxu0 0.0
        %1115 = vmatpush1.msra.mxu0 0.0
        %1116 = vmatprep.subr.mxu0 0.0
        %1117 = vmatpush1.msra.mxu0 0.0
        %1118 = vmatprep.subr.mxu0 0.0
        %1119 = vmatpush1.msra.mxu0 0.0
        %1120 = vmatprep.subr.mxu0 0.0
        %1121 = vmatpush1.msra.mxu0 0.0
        %1122 = vmatprep.subr.mxu0 0.0
        %1123 = vmatpush1.msra.mxu0 0.0
        %1124 = vmatprep.subr.mxu0 0.0
        %1125 = vmatpush1.msra.mxu0 0.0
        %1126 = vmatprep.subr.mxu0 0.0
        %1127 = vmatpush1.msra.mxu0 0.0
        %1128 = vmatprep.subr.mxu0 0.0
        %1129 = vmatpush1.msra.mxu0 0.0
        %1130 = vmatprep.subr.mxu0 0.0
        %1131 = vmatpush1.msra.mxu0 0.0
        %1132 = vmatprep.subr.mxu0 0.0
        %1133 = vmatpush1.msra.mxu0 0.0
        %1134 = vmatprep.subr.mxu0 0.0
        %1135 = vmatpush1.msra.mxu0 0.0
        %1136 = vmatprep.mubr.f32.mxu0 0.0
        %1137 = vmatmul.mubr.f32.gmra.mrb[0].mxu0 %v1070
        %v1138 = vpop.f32.mrb[0].mxu0
        %v1139 = vadd.f32 0.0, %v1138
        %v1140 = vpop.f32.mrb[0].mxu0
        %1141 = vdwg.mxu0
        %v1142 = vld [vmem:[%s7 + $0x8] sm:$0xff]
        %v1144 = vsel %vm812, %v1139, 0
        %1146 = vmatprep.subr.mxu0 0.0
        %1147 = vmatpush1.msra.mxu0 %v1142
        %1148 = vmatprep.subr.mxu0 0.0
        %1149 = vmatpush1.msra.mxu0 0.0
        %1150 = vmatprep.subr.mxu0 0.0
        %1151 = vmatpush1.msra.mxu0 0.0
        %1152 = vmatprep.subr.mxu0 0.0
        %1153 = vmatpush1.msra.mxu0 0.0
        %1154 = vmatprep.subr.mxu0 0.0
        %1155 = vmatpush1.msra.mxu0 0.0
        %1156 = vmatprep.subr.mxu0 0.0
        %1157 = vmatpush1.msra.mxu0 0.0
        %1158 = vmatprep.subr.mxu0 0.0
        %1159 = vmatpush1.msra.mxu0 0.0
        %1160 = vmatprep.subr.mxu0 0.0
        %1161 = vmatpush1.msra.mxu0 0.0
        %1162 = vmatprep.subr.mxu0 0.0
        %1163 = vmatpush1.msra.mxu0 0.0
        %1164 = vmatprep.subr.mxu0 0.0
        %1165 = vmatpush1.msra.mxu0 0.0
        %1166 = vmatprep.subr.mxu0 0.0
        %1167 = vmatpush1.msra.mxu0 0.0
        %1168 = vmatprep.subr.mxu0 0.0
        %1169 = vmatpush1.msra.mxu0 0.0
        %1170 = vmatprep.subr.mxu0 0.0
        %1171 = vmatpush1.msra.mxu0 0.0
        %1172 = vmatprep.subr.mxu0 0.0
        %1173 = vmatpush1.msra.mxu0 0.0
        %1174 = vmatprep.subr.mxu0 0.0
        %1175 = vmatpush1.msra.mxu0 0.0
        %1176 = vmatprep.subr.mxu0 0.0
        %1177 = vmatpush1.msra.mxu0 0.0
        %1178 = vmatprep.subr.mxu0 0.0
        %1179 = vmatpush1.msra.mxu0 0.0
        %1180 = vmatprep.subr.mxu0 0.0
        %1181 = vmatpush1.msra.mxu0 0.0
        %1182 = vmatprep.subr.mxu0 0.0
        %1183 = vmatpush1.msra.mxu0 0.0
        %1184 = vmatprep.subr.mxu0 0.0
        %1185 = vmatpush1.msra.mxu0 0.0
        %1186 = vmatprep.subr.mxu0 0.0
        %1187 = vmatpush1.msra.mxu0 0.0
        %1188 = vmatprep.subr.mxu0 0.0
        %1189 = vmatpush1.msra.mxu0 0.0
        %1190 = vmatprep.subr.mxu0 0.0
        %1191 = vmatpush1.msra.mxu0 0.0
        %1192 = vmatprep.subr.mxu0 0.0
        %1193 = vmatpush1.msra.mxu0 0.0
        %1194 = vmatprep.subr.mxu0 0.0
        %1195 = vmatpush1.msra.mxu0 0.0
        %1196 = vmatprep.subr.mxu0 0.0
        %1197 = vmatpush1.msra.mxu0 0.0
        %1198 = vmatprep.subr.mxu0 0.0
        %1199 = vmatpush1.msra.mxu0 0.0
        %1200 = vmatprep.subr.mxu0 0.0
        %1201 = vmatpush1.msra.mxu0 0.0
        %1202 = vmatprep.subr.mxu0 0.0
        %1203 = vmatpush1.msra.mxu0 0.0
        %1204 = vmatprep.subr.mxu0 0.0
        %1205 = vmatpush1.msra.mxu0 0.0
        %1206 = vmatprep.subr.mxu0 0.0
        %1207 = vmatpush1.msra.mxu0 0.0
        %1208 = vmatprep.subr.mxu0 0.0
        %1209 = vmatpush1.msra.mxu0 0.0
        %1210 = vmatprep.mubr.f32.mxu0 0.0
        %1211 = vmatmul.mubr.f32.gmra.mrb[0].mxu0 %v1144
        %v1212 = vpop.f32.mrb[0].mxu0
        %v1213 = vadd.f32 0.0, %v1212
        %v1214 = vpop.f32.mrb[0].mxu0
        %1215 = vdwg.mxu0
        %v1217 = vsel %vm812, %v971, 0
        %1219 = vmatprep.subr.mxu0 0.0
        %1220 = vmatpush1.msra.mxu0 %v974
        %1221 = vmatprep.subr.mxu0 0.0
        %1222 = vmatpush1.msra.mxu0 0.0
        %1223 = vmatprep.subr.mxu0 0.0
        %1224 = vmatpush1.msra.mxu0 0.0
        %1225 = vmatprep.subr.mxu0 0.0
        %1226 = vmatpush1.msra.mxu0 0.0
        %1227 = vmatprep.subr.mxu0 0.0
        %1228 = vmatpush1.msra.mxu0 0.0
        %1229 = vmatprep.subr.mxu0 0.0
        %1230 = vmatpush1.msra.mxu0 0.0
        %1231 = vmatprep.subr.mxu0 0.0
        %1232 = vmatpush1.msra.mxu0 0.0
        %1233 = vmatprep.subr.mxu0 0.0
        %1234 = vmatpush1.msra.mxu0 0.0
        %1235 = vmatprep.subr.mxu0 0.0
        %1236 = vmatpush1.msra.mxu0 0.0
        %1237 = vmatprep.subr.mxu0 0.0
        %1238 = vmatpush1.msra.mxu0 0.0
        %1239 = vmatprep.subr.mxu0 0.0
        %1240 = vmatpush1.msra.mxu0 0.0
        %1241 = vmatprep.subr.mxu0 0.0
        %1242 = vmatpush1.msra.mxu0 0.0
        %1243 = vmatprep.subr.mxu0 0.0
        %1244 = vmatpush1.msra.mxu0 0.0
        %1245 = vmatprep.subr.mxu0 0.0
        %1246 = vmatpush1.msra.mxu0 0.0
        %1247 = vmatprep.subr.mxu0 0.0
        %1248 = vmatpush1.msra.mxu0 0.0
        %1249 = vmatprep.subr.mxu0 0.0
        %1250 = vmatpush1.msra.mxu0 0.0
        %1251 = vmatprep.subr.mxu0 0.0
        %1252 = vmatpush1.msra.mxu0 0.0
        %1253 = vmatprep.subr.mxu0 0.0
        %1254 = vmatpush1.msra.mxu0 0.0
        %1255 = vmatprep.subr.mxu0 0.0
        %1256 = vmatpush1.msra.mxu0 0.0
        %1257 = vmatprep.subr.mxu0 0.0
        %1258 = vmatpush1.msra.mxu0 0.0
        %1259 = vmatprep.subr.mxu0 0.0
        %1260 = vmatpush1.msra.mxu0 0.0
        %1261 = vmatprep.subr.mxu0 0.0
        %1262 = vmatpush1.msra.mxu0 0.0
        %1263 = vmatprep.subr.mxu0 0.0
        %1264 = vmatpush1.msra.mxu0 0.0
        %1265 = vmatprep.subr.mxu0 0.0
        %1266 = vmatpush1.msra.mxu0 0.0
        %1267 = vmatprep.subr.mxu0 0.0
        %1268 = vmatpush1.msra.mxu0 0.0
        %1269 = vmatprep.subr.mxu0 0.0
        %1270 = vmatpush1.msra.mxu0 0.0
        %1271 = vmatprep.subr.mxu0 0.0
        %1272 = vmatpush1.msra.mxu0 0.0
        %1273 = vmatprep.subr.mxu0 0.0
        %1274 = vmatpush1.msra.mxu0 0.0
        %1275 = vmatprep.subr.mxu0 0.0
        %1276 = vmatpush1.msra.mxu0 0.0
        %1277 = vmatprep.subr.mxu0 0.0
        %1278 = vmatpush1.msra.mxu0 0.0
        %1279 = vmatprep.subr.mxu0 0.0
        %1280 = vmatpush1.msra.mxu0 0.0
        %1281 = vmatprep.subr.mxu0 0.0
        %1282 = vmatpush1.msra.mxu0 0.0
        %1283 = vmatprep.mubr.f32.mxu0 0.0
        %1284 = vmatmul.mubr.f32.gmra.mrb[0].mxu0 %v1217
        %v1285 = vpop.f32.mrb[0].mxu0
        %v1286 = vadd.f32 %v1213, %v1285
        %v1287 = vpop.f32.mrb[0].mxu0
        %1288 = vdwg.mxu0
        %1289 = vrot.lane.b32.xlu0 %v647, 112
        %v1290 = vpop.permute.xlu0 %1289
        %1291 = vrot.lane.b32.xlu0 %v728, 112
        %v1292 = vpop.permute.xlu0 %1291
        %v1293 = vsel %vm812, %v1290, 0
        %v1295 = vsel %vm812, %v1292, 0
        %1297 = vmatprep.subr.mxu0 0.0
        %1298 = vmatpush1.xpose.msra.mxu0 %v1295
        %1299 = vmatprep.subr.mxu0 0.0
        %1300 = vmatpush1.xpose.msra.mxu0 0.0
        %1301 = vmatprep.subr.mxu0 0.0
        %1302 = vmatpush1.xpose.msra.mxu0 0.0
        %1303 = vmatprep.subr.mxu0 0.0
        %1304 = vmatpush1.xpose.msra.mxu0 0.0
        %1305 = vmatprep.subr.mxu0 0.0
        %1306 = vmatpush1.xpose.msra.mxu0 0.0
        %1307 = vmatprep.subr.mxu0 0.0
        %1308 = vmatpush1.xpose.msra.mxu0 0.0
        %1309 = vmatprep.subr.mxu0 0.0
        %1310 = vmatpush1.xpose.msra.mxu0 0.0
        %1311 = vmatprep.subr.mxu0 0.0
        %1312 = vmatpush1.xpose.msra.mxu0 0.0
        %1313 = vmatprep.subr.mxu0 0.0
        %1314 = vmatpush1.xpose.msra.mxu0 0.0
        %1315 = vmatprep.subr.mxu0 0.0
        %1316 = vmatpush1.xpose.msra.mxu0 0.0
        %1317 = vmatprep.subr.mxu0 0.0
        %1318 = vmatpush1.xpose.msra.mxu0 0.0
        %1319 = vmatprep.subr.mxu0 0.0
        %1320 = vmatpush1.xpose.msra.mxu0 0.0
        %1321 = vmatprep.subr.mxu0 0.0
        %1322 = vmatpush1.xpose.msra.mxu0 0.0
        %1323 = vmatprep.subr.mxu0 0.0
        %1324 = vmatpush1.xpose.msra.mxu0 0.0
        %1325 = vmatprep.subr.mxu0 0.0
        %1326 = vmatpush1.xpose.msra.mxu0 0.0
        %1327 = vmatprep.subr.mxu0 0.0
        %1328 = vmatpush1.xpose.msra.mxu0 0.0
        %1329 = vmatprep.subr.mxu0 0.0
        %1330 = vmatpush1.xpose.msra.mxu0 0.0
        %1331 = vmatprep.subr.mxu0 0.0
        %1332 = vmatpush1.xpose.msra.mxu0 0.0
        %1333 = vmatprep.subr.mxu0 0.0
        %1334 = vmatpush1.xpose.msra.mxu0 0.0
        %1335 = vmatprep.subr.mxu0 0.0
        %1336 = vmatpush1.xpose.msra.mxu0 0.0
        %1337 = vmatprep.subr.mxu0 0.0
        %1338 = vmatpush1.xpose.msra.mxu0 0.0
        %1339 = vmatprep.subr.mxu0 0.0
        %1340 = vmatpush1.xpose.msra.mxu0 0.0
        %1341 = vmatprep.subr.mxu0 0.0
        %1342 = vmatpush1.xpose.msra.mxu0 0.0
        %1343 = vmatprep.subr.mxu0 0.0
        %1344 = vmatpush1.xpose.msra.mxu0 0.0
        %1345 = vmatprep.subr.mxu0 0.0
        %1346 = vmatpush1.xpose.msra.mxu0 0.0
        %1347 = vmatprep.subr.mxu0 0.0
        %1348 = vmatpush1.xpose.msra.mxu0 0.0
        %1349 = vmatprep.subr.mxu0 0.0
        %1350 = vmatpush1.xpose.msra.mxu0 0.0
        %1351 = vmatprep.subr.mxu0 0.0
        %1352 = vmatpush1.xpose.msra.mxu0 0.0
        %1353 = vmatprep.subr.mxu0 0.0
        %1354 = vmatpush1.xpose.msra.mxu0 0.0
        %1355 = vmatprep.subr.mxu0 0.0
        %1356 = vmatpush1.xpose.msra.mxu0 0.0
        %1357 = vmatprep.subr.mxu0 0.0
        %1358 = vmatpush1.xpose.msra.mxu0 0.0
        %1359 = vmatprep.subr.mxu0 0.0
        %1360 = vmatpush1.xpose.msra.mxu0 0.0
        %1361 = vmatprep.mubr.f32.mxu0 0.0
        %1362 = vmatmul.mubr.f32.gmra.mrb[0].mxu0 %v1293
        %v1363 = vpop.f32.mrb[0].mxu0
        %v1364 = vadd.f32 0.0, %v1363
        %v1365 = vpop.f32.mrb[0].mxu0
        %1366 = vdwg.mxu0
        %v1367 = vmul.f32 %v1364, 0.35355338
        %v1368 = vsel %vm812, %v1367, -inf
        %1369 = vmax.xlane.f32.xlu0 %v1368
        %v1370 = vpop.xlane.xlu0 %1369
        %v1371 = vsub.f32 %v1367, %v1370
        %v1372 = vmul.f32 %v1371, 1.442695
        %v1373 = vpow.pop %v1372
        %v1374 = vsel %vm812, %v1373, 0.0
        %1375 = vadd.xlane.f32.xlu0 %v1374
        %v1376 = vpop.xlane.xlu0 %1375
        %v1377 = vrcp.pop %v1376
        %v1378 = vmul.f32 %v1373, %v1377
        %1379 = vrot.lane.b32.xlu0 %v809, 112
        %v1380 = vpop.permute.xlu0 %1379
        %v1383 = vsel %vm812, %v1378, 0
        %1385 = vmatprep.subr.mxu0 0.0
        %1386 = vmatpush1.msra.mxu0 %v1380
        %1387 = vmatprep.subr.mxu0 0.0
        %1388 = vmatpush1.msra.mxu0 0.0
        %1389 = vmatprep.subr.mxu0 0.0
        %1390 = vmatpush1.msra.mxu0 0.0
        %1391 = vmatprep.subr.mxu0 0.0
        %1392 = vmatpush1.msra.mxu0 0.0
        %1393 = vmatprep.subr.mxu0 0.0
        %1394 = vmatpush1.msra.mxu0 0.0
        %1395 = vmatprep.subr.mxu0 0.0
        %1396 = vmatpush1.msra.mxu0 0.0
        %1397 = vmatprep.subr.mxu0 0.0
        %1398 = vmatpush1.msra.mxu0 0.0
        %1399 = vmatprep.subr.mxu0 0.0
        %1400 = vmatpush1.msra.mxu0 0.0
        %1401 = vmatprep.subr.mxu0 0.0
        %1402 = vmatpush1.msra.mxu0 0.0
        %1403 = vmatprep.subr.mxu0 0.0
        %1404 = vmatpush1.msra.mxu0 0.0
        %1405 = vmatprep.subr.mxu0 0.0
        %1406 = vmatpush1.msra.mxu0 0.0
        %1407 = vmatprep.subr.mxu0 0.0
        %1408 = vmatpush1.msra.mxu0 0.0
        %1409 = vmatprep.subr.mxu0 0.0
        %1410 = vmatpush1.msra.mxu0 0.0
        %1411 = vmatprep.subr.mxu0 0.0
        %1412 = vmatpush1.msra.mxu0 0.0
        %1413 = vmatprep.subr.mxu0 0.0
        %1414 = vmatpush1.msra.mxu0 0.0
        %1415 = vmatprep.subr.mxu0 0.0
        %1416 = vmatpush1.msra.mxu0 0.0
        %1417 = vmatprep.subr.mxu0 0.0
        %1418 = vmatpush1.msra.mxu0 0.0
        %1419 = vmatprep.subr.mxu0 0.0
        %1420 = vmatpush1.msra.mxu0 0.0
        %1421 = vmatprep.subr.mxu0 0.0
        %1422 = vmatpush1.msra.mxu0 0.0
        %1423 = vmatprep.subr.mxu0 0.0
        %1424 = vmatpush1.msra.mxu0 0.0
        %1425 = vmatprep.subr.mxu0 0.0
        %1426 = vmatpush1.msra.mxu0 0.0
        %1427 = vmatprep.subr.mxu0 0.0
        %1428 = vmatpush1.msra.mxu0 0.0
        %1429 = vmatprep.subr.mxu0 0.0
        %1430 = vmatpush1.msra.mxu0 0.0
        %1431 = vmatprep.subr.mxu0 0.0
        %1432 = vmatpush1.msra.mxu0 0.0
        %1433 = vmatprep.subr.mxu0 0.0
        %1434 = vmatpush1.msra.mxu0 0.0
        %1435 = vmatprep.subr.mxu0 0.0
        %1436 = vmatpush1.msra.mxu0 0.0
        %1437 = vmatprep.subr.mxu0 0.0
        %1438 = vmatpush1.msra.mxu0 0.0
        %1439 = vmatprep.subr.mxu0 0.0
        %1440 = vmatpush1.msra.mxu0 0.0
        %1441 = vmatprep.subr.mxu0 0.0
        %1442 = vmatpush1.msra.mxu0 0.0
        %1443 = vmatprep.subr.mxu0 0.0
        %1444 = vmatpush1.msra.mxu0 0.0
        %1445 = vmatprep.subr.mxu0 0.0
        %1446 = vmatpush1.msra.mxu0 0.0
        %1447 = vmatprep.subr.mxu0 0.0
        %1448 = vmatpush1.msra.mxu0 0.0
        %1449 = vmatprep.mubr.f32.mxu0 0.0
        %1450 = vmatmul.mubr.f32.gmra.mrb[0].mxu0 %v1383
        %v1451 = vpop.f32.mrb[0].mxu0
        %v1452 = vadd.f32 0.0, %v1451
        %v1453 = vpop.f32.mrb[0].mxu0
        %1454 = vdwg.mxu0
        %v1455 = vld [vmem:[%s7 + $0x10] sm:$0xff]
        %v1457 = vsel %vm812, %v1452, 0
        %1459 = vmatprep.subr.mxu0 0.0
        %1460 = vmatpush1.msra.mxu0 %v1455
        %1461 = vmatprep.subr.mxu0 0.0
        %1462 = vmatpush1.msra.mxu0 0.0
        %1463 = vmatprep.subr.mxu0 0.0
        %1464 = vmatpush1.msra.mxu0 0.0
        %1465 = vmatprep.subr.mxu0 0.0
        %1466 = vmatpush1.msra.mxu0 0.0
        %1467 = vmatprep.subr.mxu0 0.0
        %1468 = vmatpush1.msra.mxu0 0.0
        %1469 = vmatprep.subr.mxu0 0.0
        %1470 = vmatpush1.msra.mxu0 0.0
        %1471 = vmatprep.subr.mxu0 0.0
        %1472 = vmatpush1.msra.mxu0 0.0
        %1473 = vmatprep.subr.mxu0 0.0
        %1474 = vmatpush1.msra.mxu0 0.0
        %1475 = vmatprep.subr.mxu0 0.0
        %1476 = vmatpush1.msra.mxu0 0.0
        %1477 = vmatprep.subr.mxu0 0.0
        %1478 = vmatpush1.msra.mxu0 0.0
        %1479 = vmatprep.subr.mxu0 0.0
        %1480 = vmatpush1.msra.mxu0 0.0
        %1481 = vmatprep.subr.mxu0 0.0
        %1482 = vmatpush1.msra.mxu0 0.0
        %1483 = vmatprep.subr.mxu0 0.0
        %1484 = vmatpush1.msra.mxu0 0.0
        %1485 = vmatprep.subr.mxu0 0.0
        %1486 = vmatpush1.msra.mxu0 0.0
        %1487 = vmatprep.subr.mxu0 0.0
        %1488 = vmatpush1.msra.mxu0 0.0
        %1489 = vmatprep.subr.mxu0 0.0
        %1490 = vmatpush1.msra.mxu0 0.0
        %1491 = vmatprep.subr.mxu0 0.0
        %1492 = vmatpush1.msra.mxu0 0.0
        %1493 = vmatprep.subr.mxu0 0.0
        %1494 = vmatpush1.msra.mxu0 0.0
        %1495 = vmatprep.subr.mxu0 0.0
        %1496 = vmatpush1.msra.mxu0 0.0
        %1497 = vmatprep.subr.mxu0 0.0
        %1498 = vmatpush1.msra.mxu0 0.0
        %1499 = vmatprep.subr.mxu0 0.0
        %1500 = vmatpush1.msra.mxu0 0.0
        %1501 = vmatprep.subr.mxu0 0.0
        %1502 = vmatpush1.msra.mxu0 0.0
        %1503 = vmatprep.subr.mxu0 0.0
        %1504 = vmatpush1.msra.mxu0 0.0
        %1505 = vmatprep.subr.mxu0 0.0
        %1506 = vmatpush1.msra.mxu0 0.0
        %1507 = vmatprep.subr.mxu0 0.0
        %1508 = vmatpush1.msra.mxu0 0.0
        %1509 = vmatprep.subr.mxu0 0.0
        %1510 = vmatpush1.msra.mxu0 0.0
        %1511 = vmatprep.subr.mxu0 0.0
        %1512 = vmatpush1.msra.mxu0 0.0
        %1513 = vmatprep.subr.mxu0 0.0
        %1514 = vmatpush1.msra.mxu0 0.0
        %1515 = vmatprep.subr.mxu0 0.0
        %1516 = vmatpush1.msra.mxu0 0.0
        %1517 = vmatprep.subr.mxu0 0.0
        %1518 = vmatpush1.msra.mxu0 0.0
        %1519 = vmatprep.subr.mxu0 0.0
        %1520 = vmatpush1.msra.mxu0 0.0
        %1521 = vmatprep.subr.mxu0 0.0
        %1522 = vmatpush1.msra.mxu0 0.0
        %1523 = vmatprep.mubr.f32.mxu0 0.0
        %1524 = vmatmul.mubr.f32.gmra.mrb[0].mxu0 %v1457
        %v1525 = vpop.f32.mrb[0].mxu0
        %v1526 = vadd.f32 0.0, %v1525
        %v1527 = vpop.f32.mrb[0].mxu0
        %1528 = vdwg.mxu0
        %v1529 = vadd.f32 %v1286, %v1526
        %1530 = vrot.lane.b32.xlu0 %v647, 104
        %v1531 = vpop.permute.xlu0 %1530
        %1532 = vrot.lane.b32.xlu0 %v728, 104
        %v1533 = vpop.permute.xlu0 %1532
        %v1534 = vsel %vm812, %v1531, 0
        %v1536 = vsel %vm812, %v1533, 0
        %1538 = vmatprep.subr.mxu0 0.0
        %1539 = vmatpush1.xpose.msra.mxu0 %v1536
        %1540 = vmatprep.subr.mxu0 0.0
        %1541 = vmatpush1.xpose.msra.mxu0 0.0
        %1542 = vmatprep.subr.mxu0 0.0
        %1543 = vmatpush1.xpose.msra.mxu0 0.0
        %1544 = vmatprep.subr.mxu0 0.0
        %1545 = vmatpush1.xpose.msra.mxu0 0.0
        %1546 = vmatprep.subr.mxu0 0.0
        %1547 = vmatpush1.xpose.msra.mxu0 0.0
        %1548 = vmatprep.subr.mxu0 0.0
        %1549 = vmatpush1.xpose.msra.mxu0 0.0
        %1550 = vmatprep.subr.mxu0 0.0
        %1551 = vmatpush1.xpose.msra.mxu0 0.0
        %1552 = vmatprep.subr.mxu0 0.0
        %1553 = vmatpush1.xpose.msra.mxu0 0.0
        %1554 = vmatprep.subr.mxu0 0.0
        %1555 = vmatpush1.xpose.msra.mxu0 0.0
        %1556 = vmatprep.subr.mxu0 0.0
        %1557 = vmatpush1.xpose.msra.mxu0 0.0
        %1558 = vmatprep.subr.mxu0 0.0
        %1559 = vmatpush1.xpose.msra.mxu0 0.0
        %1560 = vmatprep.subr.mxu0 0.0
        %1561 = vmatpush1.xpose.msra.mxu0 0.0
        %1562 = vmatprep.subr.mxu0 0.0
        %1563 = vmatpush1.xpose.msra.mxu0 0.0
        %1564 = vmatprep.subr.mxu0 0.0
        %1565 = vmatpush1.xpose.msra.mxu0 0.0
        %1566 = vmatprep.subr.mxu0 0.0
        %1567 = vmatpush1.xpose.msra.mxu0 0.0
        %1568 = vmatprep.subr.mxu0 0.0
        %1569 = vmatpush1.xpose.msra.mxu0 0.0
        %1570 = vmatprep.subr.mxu0 0.0
        %1571 = vmatpush1.xpose.msra.mxu0 0.0
        %1572 = vmatprep.subr.mxu0 0.0
        %1573 = vmatpush1.xpose.msra.mxu0 0.0
        %1574 = vmatprep.subr.mxu0 0.0
        %1575 = vmatpush1.xpose.msra.mxu0 0.0
        %1576 = vmatprep.subr.mxu0 0.0
        %1577 = vmatpush1.xpose.msra.mxu0 0.0
        %1578 = vmatprep.subr.mxu0 0.0
        %1579 = vmatpush1.xpose.msra.mxu0 0.0
        %1580 = vmatprep.subr.mxu0 0.0
        %1581 = vmatpush1.xpose.msra.mxu0 0.0
        %1582 = vmatprep.subr.mxu0 0.0
        %1583 = vmatpush1.xpose.msra.mxu0 0.0
        %1584 = vmatprep.subr.mxu0 0.0
        %1585 = vmatpush1.xpose.msra.mxu0 0.0
        %1586 = vmatprep.subr.mxu0 0.0
        %1587 = vmatpush1.xpose.msra.mxu0 0.0
        %1588 = vmatprep.subr.mxu0 0.0
        %1589 = vmatpush1.xpose.msra.mxu0 0.0
        %1590 = vmatprep.subr.mxu0 0.0
        %1591 = vmatpush1.xpose.msra.mxu0 0.0
        %1592 = vmatprep.subr.mxu0 0.0
        %1593 = vmatpush1.xpose.msra.mxu0 0.0
        %1594 = vmatprep.subr.mxu0 0.0
        %1595 = vmatpush1.xpose.msra.mxu0 0.0
        %1596 = vmatprep.subr.mxu0 0.0
        %1597 = vmatpush1.xpose.msra.mxu0 0.0
        %1598 = vmatprep.subr.mxu0 0.0
        %1599 = vmatpush1.xpose.msra.mxu0 0.0
        %1600 = vmatprep.subr.mxu0 0.0
        %1601 = vmatpush1.xpose.msra.mxu0 0.0
        %1602 = vmatprep.mubr.f32.mxu0 0.0
        %1603 = vmatmul.mubr.f32.gmra.mrb[0].mxu0 %v1534
        %v1604 = vpop.f32.mrb[0].mxu0
        %v1605 = vadd.f32 0.0, %v1604
        %v1606 = vpop.f32.mrb[0].mxu0
        %1607 = vdwg.mxu0
        %v1608 = vmul.f32 %v1605, 0.35355338
        %v1609 = vsel %vm812, %v1608, -inf
        %1610 = vmax.xlane.f32.xlu0 %v1609
        %v1611 = vpop.xlane.xlu0 %1610
        %v1612 = vsub.f32 %v1608, %v1611
        %v1613 = vmul.f32 %v1612, 1.442695
        %v1614 = vpow.pop %v1613
        %v1615 = vsel %vm812, %v1614, 0.0
        %1616 = vadd.xlane.f32.xlu0 %v1615
        %v1617 = vpop.xlane.xlu0 %1616
        %v1618 = vrcp.pop %v1617
        %v1619 = vmul.f32 %v1614, %v1618
        %1620 = vrot.lane.b32.xlu0 %v809, 104
        %v1621 = vpop.permute.xlu0 %1620
        %v1624 = vsel %vm812, %v1619, 0
        %1626 = vmatprep.subr.mxu0 0.0
        %1627 = vmatpush1.msra.mxu0 %v1621
        %1628 = vmatprep.subr.mxu0 0.0
        %1629 = vmatpush1.msra.mxu0 0.0
        %1630 = vmatprep.subr.mxu0 0.0
        %1631 = vmatpush1.msra.mxu0 0.0
        %1632 = vmatprep.subr.mxu0 0.0
        %1633 = vmatpush1.msra.mxu0 0.0
        %1634 = vmatprep.subr.mxu0 0.0
        %1635 = vmatpush1.msra.mxu0 0.0
        %1636 = vmatprep.subr.mxu0 0.0
        %1637 = vmatpush1.msra.mxu0 0.0
        %1638 = vmatprep.subr.mxu0 0.0
        %1639 = vmatpush1.msra.mxu0 0.0
        %1640 = vmatprep.subr.mxu0 0.0
        %1641 = vmatpush1.msra.mxu0 0.0
        %1642 = vmatprep.subr.mxu0 0.0
        %1643 = vmatpush1.msra.mxu0 0.0
        %1644 = vmatprep.subr.mxu0 0.0
        %1645 = vmatpush1.msra.mxu0 0.0
        %1646 = vmatprep.subr.mxu0 0.0
        %1647 = vmatpush1.msra.mxu0 0.0
        %1648 = vmatprep.subr.mxu0 0.0
        %1649 = vmatpush1.msra.mxu0 0.0
        %1650 = vmatprep.subr.mxu0 0.0
        %1651 = vmatpush1.msra.mxu0 0.0
        %1652 = vmatprep.subr.mxu0 0.0
        %1653 = vmatpush1.msra.mxu0 0.0
        %1654 = vmatprep.subr.mxu0 0.0
        %1655 = vmatpush1.msra.mxu0 0.0
        %1656 = vmatprep.subr.mxu0 0.0
        %1657 = vmatpush1.msra.mxu0 0.0
        %1658 = vmatprep.subr.mxu0 0.0
        %1659 = vmatpush1.msra.mxu0 0.0
        %1660 = vmatprep.subr.mxu0 0.0
        %1661 = vmatpush1.msra.mxu0 0.0
        %1662 = vmatprep.subr.mxu0 0.0
        %1663 = vmatpush1.msra.mxu0 0.0
        %1664 = vmatprep.subr.mxu0 0.0
        %1665 = vmatpush1.msra.mxu0 0.0
        %1666 = vmatprep.subr.mxu0 0.0
        %1667 = vmatpush1.msra.mxu0 0.0
        %1668 = vmatprep.subr.mxu0 0.0
        %1669 = vmatpush1.msra.mxu0 0.0
        %1670 = vmatprep.subr.mxu0 0.0
        %1671 = vmatpush1.msra.mxu0 0.0
        %1672 = vmatprep.subr.mxu0 0.0
        %1673 = vmatpush1.msra.mxu0 0.0
        %1674 = vmatprep.subr.mxu0 0.0
        %1675 = vmatpush1.msra.mxu0 0.0
        %1676 = vmatprep.subr.mxu0 0.0
        %1677 = vmatpush1.msra.mxu0 0.0
        %1678 = vmatprep.subr.mxu0 0.0
        %1679 = vmatpush1.msra.mxu0 0.0
        %1680 = vmatprep.subr.mxu0 0.0
        %1681 = vmatpush1.msra.mxu0 0.0
        %1682 = vmatprep.subr.mxu0 0.0
        %1683 = vmatpush1.msra.mxu0 0.0
        %1684 = vmatprep.subr.mxu0 0.0
        %1685 = vmatpush1.msra.mxu0 0.0
        %1686 = vmatprep.subr.mxu0 0.0
        %1687 = vmatpush1.msra.mxu0 0.0
        %1688 = vmatprep.subr.mxu0 0.0
        %1689 = vmatpush1.msra.mxu0 0.0
        %1690 = vmatprep.mubr.f32.mxu0 0.0
        %1691 = vmatmul.mubr.f32.gmra.mrb[0].mxu0 %v1624
        %v1692 = vpop.f32.mrb[0].mxu0
        %v1693 = vadd.f32 0.0, %v1692
        %v1694 = vpop.f32.mrb[0].mxu0
        %1695 = vdwg.mxu0
        %v1696 = vld [vmem:[%s7 + $0x18] sm:$0xff]
        %v1698 = vsel %vm812, %v1693, 0
        %1700 = vmatprep.subr.mxu0 0.0
        %1701 = vmatpush1.msra.mxu0 %v1696
        %1702 = vmatprep.subr.mxu0 0.0
        %1703 = vmatpush1.msra.mxu0 0.0
        %1704 = vmatprep.subr.mxu0 0.0
        %1705 = vmatpush1.msra.mxu0 0.0
        %1706 = vmatprep.subr.mxu0 0.0
        %1707 = vmatpush1.msra.mxu0 0.0
        %1708 = vmatprep.subr.mxu0 0.0
        %1709 = vmatpush1.msra.mxu0 0.0
        %1710 = vmatprep.subr.mxu0 0.0
        %1711 = vmatpush1.msra.mxu0 0.0
        %1712 = vmatprep.subr.mxu0 0.0
        %1713 = vmatpush1.msra.mxu0 0.0
        %1714 = vmatprep.subr.mxu0 0.0
        %1715 = vmatpush1.msra.mxu0 0.0
        %1716 = vmatprep.subr.mxu0 0.0
        %1717 = vmatpush1.msra.mxu0 0.0
        %1718 = vmatprep.subr.mxu0 0.0
        %1719 = vmatpush1.msra.mxu0 0.0
        %1720 = vmatprep.subr.mxu0 0.0
        %1721 = vmatpush1.msra.mxu0 0.0
        %1722 = vmatprep.subr.mxu0 0.0
        %1723 = vmatpush1.msra.mxu0 0.0
        %1724 = vmatprep.subr.mxu0 0.0
        %1725 = vmatpush1.msra.mxu0 0.0
        %1726 = vmatprep.subr.mxu0 0.0
        %1727 = vmatpush1.msra.mxu0 0.0
        %1728 = vmatprep.subr.mxu0 0.0
        %1729 = vmatpush1.msra.mxu0 0.0
        %1730 = vmatprep.subr.mxu0 0.0
        %1731 = vmatpush1.msra.mxu0 0.0
        %1732 = vmatprep.subr.mxu0 0.0
        %1733 = vmatpush1.msra.mxu0 0.0
        %1734 = vmatprep.subr.mxu0 0.0
        %1735 = vmatpush1.msra.mxu0 0.0
        %1736 = vmatprep.subr.mxu0 0.0
        %1737 = vmatpush1.msra.mxu0 0.0
        %1738 = vmatprep.subr.mxu0 0.0
        %1739 = vmatpush1.msra.mxu0 0.0
        %1740 = vmatprep.subr.mxu0 0.0
        %1741 = vmatpush1.msra.mxu0 0.0
        %1742 = vmatprep.subr.mxu0 0.0
        %1743 = vmatpush1.msra.mxu0 0.0
        %1744 = vmatprep.subr.mxu0 0.0
        %1745 = vmatpush1.msra.mxu0 0.0
        %1746 = vmatprep.subr.mxu0 0.0
        %1747 = vmatpush1.msra.mxu0 0.0
        %1748 = vmatprep.subr.mxu0 0.0
        %1749 = vmatpush1.msra.mxu0 0.0
        %1750 = vmatprep.subr.mxu0 0.0
        %1751 = vmatpush1.msra.mxu0 0.0
        %1752 = vmatprep.subr.mxu0 0.0
        %1753 = vmatpush1.msra.mxu0 0.0
        %1754 = vmatprep.subr.mxu0 0.0
        %1755 = vmatpush1.msra.mxu0 0.0
        %1756 = vmatprep.subr.mxu0 0.0
        %1757 = vmatpush1.msra.mxu0 0.0
        %1758 = vmatprep.subr.mxu0 0.0
        %1759 = vmatpush1.msra.mxu0 0.0
        %1760 = vmatprep.subr.mxu0 0.0
        %1761 = vmatpush1.msra.mxu0 0.0
        %1762 = vmatprep.subr.mxu0 0.0
        %1763 = vmatpush1.msra.mxu0 0.0
        %1764 = vmatprep.mubr.f32.mxu0 0.0
        %1765 = vmatmul.mubr.f32.gmra.mrb[0].mxu0 %v1698
        %v1766 = vpop.f32.mrb[0].mxu0
        %v1767 = vadd.f32 0.0, %v1766
        %v1768 = vpop.f32.mrb[0].mxu0
        %1769 = vdwg.mxu0
        %v1770 = vadd.f32 %v1529, %v1767
        %v1771 = vld [vmem:[%s8] sm:$0x1]
        %v1773 = vlaneseq
        %v1774 = vshrl.u32 %v1773, 7
        %v1775 = vsub.s32 0, %v1774
        %v1776 = vrot.slane %v1771, %v1775
        %v1778 = vadd.f32 %v1770, %v1776
        %v1779 = vadd.f32 %v564, %v1778
        %v1780 = vsel %vm576, %v1779, 0.0
        %1781 = vadd.xlane.f32.xlu0 %v1780
        %v1782 = vpop.xlane.xlu0 %1781
        %v1783 = vrcp.pop 32.0
        %v1784 = vmul.f32 %v1782, %v1783
        %v1785 = vsub.f32 %v1779, %v1784
        %v1786 = vmul.f32 %v1785, %v1785
        %v1787 = vsel %vm576, %v1786, 0.0
        %1788 = vadd.xlane.f32.xlu0 %v1787
        %v1789 = vpop.xlane.xlu0 %1788
        %v1790 = vmul.f32 %v1789, %v1783
        %v1791 = vadd.f32 %v1790, 1e-05
        %v1792 = vrsqrt.pop %v1791
        %v1793 = vmul.f32 %v1785, %v1792
        %v1794 = vld [vmem:[%s9] sm:$0x1]
        %v1796 = vlaneseq
        %v1797 = vshrl.u32 %v1796, 7
        %v1798 = vsub.s32 0, %v1797
        %v1799 = vrot.slane %v1794, %v1798
        %v1801 = vmul.f32 %v1793, %v1799
        %v1802 = vld [vmem:[%s10] sm:$0x1]
        %v1804 = vlaneseq
        %v1805 = vshrl.u32 %v1804, 7
        %v1806 = vsub.s32 0, %v1805
        %v1807 = vrot.slane %v1802, %v1806
        %v1809 = vadd.f32 %v1801, %v1807
        %v1810 = vld [vmem:[%s11] sm:$0xff]
        %v1811 = vld [vmem:[%s11 + $0x8] sm:$0xff]
        %v1812 = vld [vmem:[%s11 + $0x10] sm:$0xff]
        %v1813 = vld [vmem:[%s11 + $0x18] sm:$0xff]
        %v1814 = vld [vmem:[%s12] sm:$0x1]
        %v1816 = vlaneseq
        %v1817 = vshrl.u32 %v1816, 7
        %v1818 = vsub.s32 0, %v1817
        %v1819 = vrot.slane %v1814, %v1818
        %v1822 = vsel %vm576, %v1809, 0
        %1824 = vmatprep.subr.mxu0 0.0
        %1825 = vmatpush1.msra.mxu0 %v1810
        %1826 = vmatprep.subr.mxu0 0.0
        %1827 = vmatpush1.msra.mxu0 %v1811
        %1828 = vmatprep.subr.mxu0 0.0
        %1829 = vmatpush1.msra.mxu0 %v1812
        %1830 = vmatprep.subr.mxu0 0.0
        %1831 = vmatpush1.msra.mxu0 %v1813
        %1832 = vmatprep.subr.mxu0 0.0
        %1833 = vmatpush1.msra.mxu0 0.0
        %1834 = vmatprep.subr.mxu0 0.0
        %1835 = vmatpush1.msra.mxu0 0.0
        %1836 = vmatprep.subr.mxu0 0.0
        %1837 = vmatpush1.msra.mxu0 0.0
        %1838 = vmatprep.subr.mxu0 0.0
        %1839 = vmatpush1.msra.mxu0 0.0
        %1840 = vmatprep.subr.mxu0 0.0
        %1841 = vmatpush1.msra.mxu0 0.0
        %1842 = vmatprep.subr.mxu0 0.0
        %1843 = vmatpush1.msra.mxu0 0.0
        %1844 = vmatprep.subr.mxu0 0.0
        %1845 = vmatpush1.msra.mxu0 0.0
        %1846 = vmatprep.subr.mxu0 0.0
        %1847 = vmatpush1.msra.mxu0 0.0
        %1848 = vmatprep.subr.mxu0 0.0
        %1849 = vmatpush1.msra.mxu0 0.0
        %1850 = vmatprep.subr.mxu0 0.0
        %1851 = vmatpush1.msra.mxu0 0.0
        %1852 = vmatprep.subr.mxu0 0.0
        %1853 = vmatpush1.msra.mxu0 0.0
        %1854 = vmatprep.subr.mxu0 0.0
        %1855 = vmatpush1.msra.mxu0 0.0
        %1856 = vmatprep.subr.mxu0 0.0
        %1857 = vmatpush1.msra.mxu0 0.0
        %1858 = vmatprep.subr.mxu0 0.0
        %1859 = vmatpush1.msra.mxu0 0.0
        %1860 = vmatprep.subr.mxu0 0.0
        %1861 = vmatpush1.msra.mxu0 0.0
        %1862 = vmatprep.subr.mxu0 0.0
        %1863 = vmatpush1.msra.mxu0 0.0
        %1864 = vmatprep.subr.mxu0 0.0
        %1865 = vmatpush1.msra.mxu0 0.0
        %1866 = vmatprep.subr.mxu0 0.0
        %1867 = vmatpush1.msra.mxu0 0.0
        %1868 = vmatprep.subr.mxu0 0.0
        %1869 = vmatpush1.msra.mxu0 0.0
        %1870 = vmatprep.subr.mxu0 0.0
        %1871 = vmatpush1.msra.mxu0 0.0
        %1872 = vmatprep.subr.mxu0 0.0
        %1873 = vmatpush1.msra.mxu0 0.0
        %1874 = vmatprep.subr.mxu0 0.0
        %1875 = vmatpush1.msra.mxu0 0.0
        %1876 = vmatprep.subr.mxu0 0.0
        %1877 = vmatpush1.msra.mxu0 0.0
        %1878 = vmatprep.subr.mxu0 0.0
        %1879 = vmatpush1.msra.mxu0 0.0
        %1880 = vmatprep.subr.mxu0 0.0
        %1881 = vmatpush1.msra.mxu0 0.0
        %1882 = vmatprep.subr.mxu0 0.0
        %1883 = vmatpush1.msra.mxu0 0.0
        %1884 = vmatprep.subr.mxu0 0.0
        %1885 = vmatpush1.msra.mxu0 0.0
        %1886 = vmatprep.subr.mxu0 0.0
        %1887 = vmatpush1.msra.mxu0 0.0
        %1888 = vmatprep.mubr.f32.mxu0 0.0
        %1889 = vmatmul.mubr.f32.gmra.mrb[0].mxu0 %v1822
        %v1890 = vpop.f32.mrb[0].mxu0
        %v1891 = vadd.f32 %v1819, %v1890
        %v1892 = vpop.f32.mrb[0].mxu0
        %1893 = vdwg.mxu0
        %v1894 = vmax.f32 %v1891, 0.0
        %v1895 = vld [vmem:[%s13] sm:$0xff]
        %v1896 = vld [vmem:[%s13 + $0x8] sm:$0xff]
        %v1897 = vld [vmem:[%s13 + $0x10] sm:$0xff]
        %v1898 = vld [vmem:[%s13 + $0x18] sm:$0xff]
        %v1899 = vld [vmem:[%s13 + $0x20] sm:$0xff]
        %v1900 = vld [vmem:[%s13 + $0x28] sm:$0xff]
        %v1901 = vld [vmem:[%s13 + $0x30] sm:$0xff]
        %v1902 = vld [vmem:[%s13 + $0x38] sm:$0xff]
        %v1903 = vld [vmem:[%s13 + $0x40] sm:$0xff]
        %v1904 = vld [vmem:[%s13 + $0x48] sm:$0xff]
        %v1905 = vld [vmem:[%s13 + $0x50] sm:$0xff]
        %v1906 = vld [vmem:[%s13 + $0x58] sm:$0xff]
        %v1907 = vld [vmem:[%s13 + $0x60] sm:$0xff]
        %v1908 = vld [vmem:[%s13 + $0x68] sm:$0xff]
        %v1909 = vld [vmem:[%s13 + $0x70] sm:$0xff]
        %v1910 = vld [vmem:[%s13 + $0x78] sm:$0xff]
        %v1911 = vld [vmem:[%s14] sm:$0x1]
        %v1913 = vlaneseq
        %v1914 = vshrl.u32 %v1913, 7
        %v1915 = vsub.s32 0, %v1914
        %v1916 = vrot.slane %v1911, %v1915
        %1918 = vmatprep.subr.mxu0 0.0
        %1919 = vmatpush1.msra.mxu0 %v1895
        %1920 = vmatprep.subr.mxu0 0.0
        %1921 = vmatpush1.msra.mxu0 %v1896
        %1922 = vmatprep.subr.mxu0 0.0
        %1923 = vmatpush1.msra.mxu0 %v1897
        %1924 = vmatprep.subr.mxu0 0.0
        %1925 = vmatpush1.msra.mxu0 %v1898
        %1926 = vmatprep.subr.mxu0 0.0
        %1927 = vmatpush1.msra.mxu0 %v1899
        %1928 = vmatprep.subr.mxu0 0.0
        %1929 = vmatpush1.msra.mxu0 %v1900
        %1930 = vmatprep.subr.mxu0 0.0
        %1931 = vmatpush1.msra.mxu0 %v1901
        %1932 = vmatprep.subr.mxu0 0.0
        %1933 = vmatpush1.msra.mxu0 %v1902
        %1934 = vmatprep.subr.mxu0 0.0
        %1935 = vmatpush1.msra.mxu0 %v1903
        %1936 = vmatprep.subr.mxu0 0.0
        %1937 = vmatpush1.msra.mxu0 %v1904
        %1938 = vmatprep.subr.mxu0 0.0
        %1939 = vmatpush1.msra.mxu0 %v1905
        %1940 = vmatprep.subr.mxu0 0.0
        %1941 = vmatpush1.msra.mxu0 %v1906
        %1942 = vmatprep.subr.mxu0 0.0
        %1943 = vmatpush1.msra.mxu0 %v1907
        %1944 = vmatprep.subr.mxu0 0.0
        %1945 = vmatpush1.msra.mxu0 %v1908
        %1946 = vmatprep.subr.mxu0 0.0
        %1947 = vmatpush1.msra.mxu0 %v1909
        %1948 = vmatprep.subr.mxu0 0.0
        %1949 = vmatpush1.msra.mxu0 %v1910
        %1950 = vmatprep.subr.mxu0 0.0
        %1951 = vmatpush1.msra.mxu0 0.0
        %1952 = vmatprep.subr.mxu0 0.0
        %1953 = vmatpush1.msra.mxu0 0.0
        %1954 = vmatprep.subr.mxu0 0.0
        %1955 = vmatpush1.msra.mxu0 0.0
        %1956 = vmatprep.subr.mxu0 0.0
        %1957 = vmatpush1.msra.mxu0 0.0
        %1958 = vmatprep.subr.mxu0 0.0
        %1959 = vmatpush1.msra.mxu0 0.0
        %1960 = vmatprep.subr.mxu0 0.0
        %1961 = vmatpush1.msra.mxu0 0.0
        %1962 = vmatprep.subr.mxu0 0.0
        %1963 = vmatpush1.msra.mxu0 0.0
        %1964 = vmatprep.subr.mxu0 0.0
        %1965 = vmatpush1.msra.mxu0 0.0
        %1966 = vmatprep.subr.mxu0 0.0
        %1967 = vmatpush1.msra.mxu0 0.0
        %1968 = vmatprep.subr.mxu0 0.0
        %1969 = vmatpush1.msra.mxu0 0.0
        %1970 = vmatprep.subr.mxu0 0.0
        %1971 = vmatpush1.msra.mxu0 0.0
        %1972 = vmatprep.subr.mxu0 0.0
        %1973 = vmatpush1.msra.mxu0 0.0
        %1974 = vmatprep.subr.mxu0 0.0
        %1975 = vmatpush1.msra.mxu0 0.0
        %1976 = vmatprep.subr.mxu0 0.0
        %1977 = vmatpush1.msra.mxu0 0.0
        %1978 = vmatprep.subr.mxu0 0.0
        %1979 = vmatpush1.msra.mxu0 0.0
        %1980 = vmatprep.subr.mxu0 0.0
        %1981 = vmatpush1.msra.mxu0 0.0
        %1982 = vmatprep.mubr.f32.mxu0 0.0
        %1983 = vmatmul.mubr.f32.gmra.mrb[0].mxu0 %v1894
        %v1984 = vpop.f32.mrb[0].mxu0
        %v1985 = vadd.f32 %v1916, %v1984
        %v1986 = vpop.f32.mrb[0].mxu0
        %1987 = vdwg.mxu0
        %v1988 = vadd.f32 %v1809, %v1985
        %v1989 = vsel %vm576, %v1988, 0.0
        %1990 = vadd.xlane.f32.xlu0 %v1989
        %v1991 = vpop.xlane.xlu0 %1990
        %v1992 = vmul.f32 %v1991, %v1783
        %v1993 = vsub.f32 %v1988, %v1992
        %v1994 = vmul.f32 %v1993, %v1993
        %v1995 = vsel %vm576, %v1994, 0.0
        %1996 = vadd.xlane.f32.xlu0 %v1995
        %v1997 = vpop.xlane.xlu0 %1996
        %v1998 = vmul.f32 %v1997, %v1783
        %v1999 = vadd.f32 %v1998, 1e-05
        %v2000 = vrsqrt.pop %v1999
        %v2001 = vmul.f32 %v1993, %v2000
        %v2002 = vld [vmem:[%s15] sm:$0x1]
        %v2004 = vlaneseq
        %v2005 = vshrl.u32 %v2004, 7
        %v2006 = vsub.s32 0, %v2005
        %v2007 = vrot.slane %v2002, %v2006
        %v2009 = vmul.f32 %v2001, %v2007
        %v2010 = vld [vmem:[%s16] sm:$0x1]
        %v2012 = vlaneseq
        %v2013 = vshrl.u32 %v2012, 7
        %v2014 = vsub.s32 0, %v2013
        %v2015 = vrot.slane %v2010, %v2014
        %v2017 = vadd.f32 %v2009, %v2015
        %2018 = vst.msk [vmem:[%s563] sm:$0xff] %vm576, %v2017
        %s2019 = sand.u32 %s404, 1
        %s2020 = scalar_lea.sflag [#allocation4], %s2019
        %s2021 = sand.u32 %s404, 1
        %s2022 = smul.addr %s2021, 8
        %s2023 = scalar_lea.vmem [#allocation5], %s2022
        // Predicated region
        $region93: #{tpu_custom_call.1} parent=87 // pred_check
          %p2024 = pneg %p414
        $region94: #{tpu_custom_call.1} parent=87 // pred_check_branch
          %2026 = sbr.rel (%p2024) target = $region96
        $region95: #{tpu_custom_call.1} parent=87 // pred_region
          %s2028 = ssub.s32 128, 128
          %2029 = vsyncadd %s2020, %s2028
          %s2030 = smul.addr %s34, 128
          %s2031 = scalar_lea.hbm %s17, %s2030
          %s2033 = sshll.u32 %s2023, 4
          %s2034 = int_to_ptr.vmem [resolvable:$true] %s2033
          %2036 = dma.vmem_to_hbm [thread:$0]  %s2034, 128, %s2031, %s2020
        $region96: #{tpu_custom_call.1} parent=87 // pred_fallthru
          _
      $region88: #{tpu_custom_call.1} parent=5 // pred_fallthru
        _
      %p2037 = scmp.le.s32.totalorder 2, %s29
      // Predicated region
      $region97: #{tpu_custom_call.1} parent=5 // pred_check
        %p2038 = pneg %p2037
      $region98: #{tpu_custom_call.1} parent=5 // pred_check_branch
        %2040 = sbr.rel (%p2038) target = $region100
      $region99: #{tpu_custom_call.1} parent=5 // pred_region
        %s2041 = ssub.s32 %s29, 2
        // Predicated region
        $region101: #{tpu_custom_call.1} parent=99 // pred_check
          %p2042 = pneg %p420
        $region102: #{tpu_custom_call.1} parent=99 // pred_check_branch
          %2044 = sbr.rel (%p2042) target = $region104
        $region103: #{tpu_custom_call.1} parent=99 // pred_region
          %s2045 = sand.u32 %s405, 1
          %s2046 = scalar_lea.sflag [#allocation4], %s2045
          %s2047 = sand.u32 %s405, 1
          %s2048 = smul.addr %s2047, 8
          %s2049 = scalar_lea.vmem [#allocation5], %s2048
          %2050 = dma.done %s2046, 128
        $region104: #{tpu_custom_call.1} parent=99 // pred_fallthru
          _
      $region100: #{tpu_custom_call.1} parent=5 // pred_fallthru
        _
    $region6: #{tpu_custom_call.1} parent=1 // loop_footer
      %s33 = sadd.s32 1, %s29
    $region7: #{tpu_custom_call.1} parent=1 // loop_footer_branch
      %28 = sbr.rel target = $region3
    $region8: #{tpu_custom_call.1} parent=1 // loop_exit
      _
    %2051 = vsyncpa [#allocation3], 1
    %s2052 = scalar_lea.sflag [#allocation3], 1
    %2053 = vsyncpa %s2052, 1
    %2054 = vsyncpa [#allocation4], 1
    %s2055 = scalar_lea.sflag [#allocation4], 1
    %2056 = vsyncpa %s2055, 1

</llo_original>
